<compile_context>
chip_gen: v5e
topology: v5e:2x2
jax: 0.10.0
libtpu: 0.0.40
codegen_flags: <defaults>
</compile_context>

<pallas_src>
import jax
import jax.numpy as jnp
from jax.experimental import pallas as pl
from jax.experimental.pallas import tpu as pltpu


# ---------------------------------------------------------------------------
# Bilinear interpolation matrices (PyTorch F.interpolate, align_corners=False)
# ---------------------------------------------------------------------------
def bilinear_matrix(out_size: int, in_size: int) -> jnp.ndarray:
    """Row-interpolation matrix M of shape (out_size, in_size): up = M @ x."""
    scale = in_size / out_size
    i = jnp.arange(out_size, dtype=jnp.float32)
    src = jnp.maximum((i + 0.5) * scale - 0.5, 0.0)           # PyTorch clamps to 0
    x0 = jnp.clip(jnp.floor(src).astype(jnp.int32), 0, in_size - 1)
    x1 = jnp.minimum(x0 + 1, in_size - 1)
    w1 = src - x0.astype(jnp.float32)
    w0 = 1.0 - w1
    m = jnp.zeros((out_size, in_size), jnp.float32)
    rows = jnp.arange(out_size)
    m = m.at[rows, x0].add(w0)
    m = m.at[rows, x1].add(w1)
    return m


def _block_diag(m: jnp.ndarray, reps: int) -> jnp.ndarray:
    """Block-diagonal tiling of `m` (w, W) -> (reps*w, reps*W)."""
    w, W = m.shape
    out = jnp.zeros((reps * w, reps * W), m.dtype)
    for b in range(reps):
        out = out.at[b * w:(b + 1) * w, b * W:(b + 1) * W].set(m)
    return out


def _to_hbw(x4d: jnp.ndarray) -> jnp.ndarray:
    """(N, C, H, W) -> (H, N*C*W): out[I, b*W + J] = x[b, I, J], b = n*C + c."""
    N, C, H, W = x4d.shape
    return x4d.reshape(N * C, H, W).transpose(1, 0, 2).reshape(H, N * C * W)


# ---------------------------------------------------------------------------
# Fused Pallas kernel: all (scale, aux-task) interpolation-L1 items plus all
# full-resolution L1 items in a single VMEM-resident invocation.
# ---------------------------------------------------------------------------
def _build_fused_kernel(items, n_inputs):
    def kernel(*refs):
        in_refs = refs[:n_inputs]
        out_ref = refs[n_inputs]
        out_ref[...] = jnp.zeros_like(out_ref)
        for it in items:                        # statically unrolled at trace time
            gt = in_refs[it["gt"]][...].astype(jnp.float32)        # (H, bc*W)
            if it["kind"] == "interp":
                x = in_refs[it["x"]][...].astype(jnp.float32)      # (h, bc*w)
                wh = in_refs[it["wh"]][...]                        # (H, h)
                wwb = in_refs[it["ww"]][...]                       # (bc*w, bc*W)
                u = jnp.dot(wh, x, preferred_element_type=jnp.float32)    # (H, bc*w)
                up = jnp.dot(u, wwb, preferred_element_type=jnp.float32)  # (H, bc*W)
            else:                                                  # full-res head
                up = in_refs[it["x"]][...].astype(jnp.float32)     # (H, bc*W)
            s = jnp.sum(jnp.abs(up - gt), keepdims=True)           # (1, 1)
            out_ref[pl.ds(it["row"], 1), :] = jnp.broadcast_to(
                s * it["inv_count"], (1, 128))
    return kernel


# ---------------------------------------------------------------------------
# MTINet_TrNet_Loss forward (layout prep in plain JAX, hot path in one kernel)
# ---------------------------------------------------------------------------
def mtinet_trnet_loss(pred, gt, tasks, auxilary_tasks, loss_weights):
    inputs = []
    items = []
    names = []           # (output dict key, task used for the loss weight)

    def add_input(arr):
        inputs.append(arr)
        return len(inputs) - 1

    wh_cache, ww_cache, gt_cache = {}, {}, {}

    def gt_input(task):
        if task not in gt_cache:
            gt_cache[task] = add_input(_to_hbw(gt[task]))          # (H, bc*W)
        return gt_cache[task]

    row = 0
    # deep-supervision heads: bilinear upsample + L1 against gt
    for scale in range(4):
        pred_scale = pred['deep_supervision']['scale_%s' % scale]
        for t in auxilary_tasks:
            x = pred_scale[t]
            N, C, h, w = x.shape
            Hg, Wg = gt[t].shape[-2:]
            bc = N * C
            x_idx = add_input(_to_hbw(x))                          # (h, bc*w)
            kh = (Hg, h)
            if kh not in wh_cache:
                wh_cache[kh] = add_input(bilinear_matrix(Hg, h))   # (H, h)
            kw = (Wg, w, bc)
            if kw not in ww_cache:
                ww_cache[kw] = add_input(
                    _block_diag(bilinear_matrix(Wg, w).T, bc))     # (bc*w, bc*W)
            items.append(dict(kind="interp", x=x_idx, wh=wh_cache[kh],
                              ww=ww_cache[kw], gt=gt_input(t),
                              inv_count=1.0 / float(bc * Hg * Wg), row=row))
            names.append(('scale_%d_%s' % (scale, t), t))
            row += 1

    # full-resolution heads: plain L1 (no interpolation in the original either)
    for t in tasks:
        x = pred[t]
        N, C, Hp, Wp = x.shape
        bc = N * C
        x_idx = add_input(_to_hbw(x))                              # (H, bc*W)
        items.append(dict(kind="direct", x=x_idx, gt=gt_input(t),
                          inv_count=1.0 / float(bc * Hp * Wp), row=row))
        names.append((t, t))
        row += 1

    n_items = row
    kernel = _build_fused_kernel(items, len(inputs))

    out_arr = pl.pallas_call(
        kernel,
        out_shape=jax.ShapeDtypeStruct((n_items, 128), jnp.float32),
        in_specs=[pl.BlockSpec(memory_space=pltpu.MemorySpace.VMEM)
                  for _ in inputs],
        out_specs=pl.BlockSpec(memory_space=pltpu.MemorySpace.VMEM),
    )(*inputs)

    losses = out_arr[:, 0]
    out = {}
    total = jnp.float32(0.0)
    for i, (name, task) in enumerate(names):
        v = losses[i]
        out[name] = v
        total = total + loss_weights[task] * v
    out['total'] = total
    return out


# ---------------------------------------------------------------------------
# Pure-JAX references (sanity check only)
# ---------------------------------------------------------------------------
def _ref_interp_l1(pred_nchw, gt_nchw):
    N, C, h, w = pred_nchw.shape
    H, W = gt_nchw.shape[-2:]
    wh = bilinear_matrix(H, h)
    ww = bilinear_matrix(W, w)
    up = jnp.einsum('Hh,nchw,Ww->ncHW', wh, pred_nchw.astype(jnp.float32), ww)
    return jnp.mean(jnp.abs(up - gt_nchw.astype(jnp.float32)))


def _ref_l1(a, b):
    return jnp.mean(jnp.abs(a.astype(jnp.float32) - b.astype(jnp.float32)))


if __name__ == "__main__":
    key = jax.random.PRNGKey(0)

    tasks = ['semseg', 'depth']
    auxilary_tasks = ['semseg', 'depth']
    loss_weights = {'semseg': 1.0, 'depth': 0.5}
    n_ch = {'semseg': 4, 'depth': 1}

    N, IMG = 2, 16  # batch, gt spatial size

    keys = iter(jax.random.split(key, 64))
    gt = {t: jax.random.normal(next(keys), (N, n_ch[t], IMG, IMG), jnp.float32)
          for t in tasks}

    pred = {'deep_supervision': {}}
    for t in tasks:
        pred[t] = jax.random.normal(next(keys), (N, n_ch[t], IMG, IMG), jnp.float32)
    for scale in range(4):
        sz = IMG // (2 ** scale)   # 16, 8, 4, 2
        pred['deep_supervision']['scale_%s' % scale] = {
            t: jax.random.normal(next(keys), (N, n_ch[t], sz, sz), jnp.float32)
            for t in auxilary_tasks
        }

    out = mtinet_trnet_loss(pred, gt, tasks, auxilary_tasks, loss_weights)
    out = jax.tree_util.tree_map(jax.block_until_ready, out)

    # sanity check against a plain-JAX reference of the same math
    ref_total = 0.0
    for scale in range(4):
        for t in auxilary_tasks:
            v = float(_ref_interp_l1(
                pred['deep_supervision']['scale_%s' % scale][t], gt[t]))
            got = float(out['scale_%d_%s' % (scale, t)])
            assert abs(got - v) < 2e-3, ('scale_%d_%s' % (scale, t), got, v)
            ref_total += loss_weights[t] * v
    for t in tasks:
        v = float(_ref_l1(pred[t], gt[t]))
        got = float(out[t])
        assert abs(got - v) < 2e-3, (t, got, v)
        ref_total += loss_weights[t] * v
    assert abs(float(out['total']) - ref_total) < 1e-2, (
        float(out['total']), ref_total)

    print("KERNEL_OK")
</pallas_src>

<mosaic_0001>
module attributes {stable_mosaic.version = 11 : i64} {
  func.func @kernel(%arg0: memref<16x128xf32, #tpu.memory_space<vmem>>, %arg1: memref<16x16xf32, #tpu.memory_space<vmem>>, %arg2: memref<128x128xf32, #tpu.memory_space<vmem>>, %arg3: memref<16x128xf32, #tpu.memory_space<vmem>>, %arg4: memref<16x32xf32, #tpu.memory_space<vmem>>, %arg5: memref<32x32xf32, #tpu.memory_space<vmem>>, %arg6: memref<16x32xf32, #tpu.memory_space<vmem>>, %arg7: memref<8x64xf32, #tpu.memory_space<vmem>>, %arg8: memref<16x8xf32, #tpu.memory_space<vmem>>, %arg9: memref<64x128xf32, #tpu.memory_space<vmem>>, %arg10: memref<8x16xf32, #tpu.memory_space<vmem>>, %arg11: memref<16x32xf32, #tpu.memory_space<vmem>>, %arg12: memref<4x32xf32, #tpu.memory_space<vmem>>, %arg13: memref<16x4xf32, #tpu.memory_space<vmem>>, %arg14: memref<32x128xf32, #tpu.memory_space<vmem>>, %arg15: memref<4x8xf32, #tpu.memory_space<vmem>>, %arg16: memref<8x32xf32, #tpu.memory_space<vmem>>, %arg17: memref<2x16xf32, #tpu.memory_space<vmem>>, %arg18: memref<16x2xf32, #tpu.memory_space<vmem>>, %arg19: memref<16x128xf32, #tpu.memory_space<vmem>>, %arg20: memref<2x4xf32, #tpu.memory_space<vmem>>, %arg21: memref<4x32xf32, #tpu.memory_space<vmem>>, %arg22: memref<16x128xf32, #tpu.memory_space<vmem>>, %arg23: memref<16x32xf32, #tpu.memory_space<vmem>>, %arg24: memref<10x128xf32, #tpu.memory_space<vmem>>) attributes {dimension_semantics = [], scalar_prefetch = 0 : i64, scratch_operands = 0 : i64, tpu.core_type = #tpu.core_type<tc>} {
    %cst = arith.constant 0.000000e+00 : f32
    %0 = vector.broadcast %cst : f32 to vector<10x128xf32>
    %c0 = arith.constant 0 : index
    %c0_0 = arith.constant 0 : index
    %1 = vector.load %arg24[%c0, %c0_0] : memref<10x128xf32, #tpu.memory_space<vmem>>, vector<10x128xf32>
    tpu.vector_store %arg24[%c0, %c0_0], %0 {strides = array<i32>} : memref<10x128xf32, #tpu.memory_space<vmem>>, vector<10x128xf32>,
    %c0_1 = arith.constant 0 : index
    %c0_2 = arith.constant 0 : index
    %2 = vector.load %arg3[%c0_1, %c0_2] : memref<16x128xf32, #tpu.memory_space<vmem>>, vector<16x128xf32>
    %c0_3 = arith.constant 0 : index
    %c0_4 = arith.constant 0 : index
    %3 = vector.load %arg0[%c0_3, %c0_4] : memref<16x128xf32, #tpu.memory_space<vmem>>, vector<16x128xf32>
    %c0_5 = arith.constant 0 : index
    %c0_6 = arith.constant 0 : index
    %4 = vector.load %arg1[%c0_5, %c0_6] : memref<16x16xf32, #tpu.memory_space<vmem>>, vector<16x16xf32>
    %c0_7 = arith.constant 0 : index
    %c0_8 = arith.constant 0 : index
    %5 = vector.load %arg2[%c0_7, %c0_8] : memref<128x128xf32, #tpu.memory_space<vmem>>, vector<128x128xf32>
    %cst_9 = arith.constant dense<0.000000e+00> : vector<16x128xf32>
    %6 = tpu.matmul %4, %3, %cst_9 {dimension_numbers = #tpu.dot_dimension_numbers<[1], [0], [0], [1], [0, 0, 1, 1], [], []>} : vector<16x16xf32>, vector<16x128xf32>, vector<16x128xf32> -> vector<16x128xf32>
    %cst_10 = arith.constant dense<0.000000e+00> : vector<16x128xf32>
    %7 = tpu.matmul %6, %5, %cst_10 {dimension_numbers = #tpu.dot_dimension_numbers<[1], [0], [0], [1], [0, 0, 1, 1], [], []>} : vector<16x128xf32>, vector<128x128xf32>, vector<16x128xf32> -> vector<16x128xf32>
    %8 = arith.subf %7, %2 : vector<16x128xf32>
    %9 = math.absf %8 : vector<16x128xf32>
    %10 = vector.shape_cast %9 : vector<16x128xf32> to vector<1x16x128xf32>
    %cst_11 = arith.constant dense<0.000000e+00> : vector<1xf32>
    %11 = vector.multi_reduction <add>, %10, %cst_11 [1, 2] : vector<1x16x128xf32> to vector<1xf32>
    %12 = vector.shape_cast %11 : vector<1xf32> to vector<1x1x1xf32>
    %13 = vector.extract %12[0, 0, 0] : f32 from vector<1x1x1xf32>
    %14 = vector.broadcast %13 : f32 to vector<1x1xf32>
    %cst_12 = arith.constant 4.8828125E-4 : f32
    %15 = vector.broadcast %cst_12 : f32 to vector<1x1xf32>
    %16 = arith.mulf %14, %15 : vector<1x1xf32>
    %17 = vector.shape_cast %16 : vector<1x1xf32> to vector<1x1xf32>
    %18 = vector.broadcast %17 : vector<1x1xf32> to vector<1x128xf32>
    %c0_13 = arith.constant 0 : index
    %c0_14 = arith.constant 0 : index
    %19 = vector.load %arg24[%c0_13, %c0_14] : memref<10x128xf32, #tpu.memory_space<vmem>>, vector<1x128xf32>
    tpu.vector_store %arg24[%c0_13, %c0_14], %18 {strides = array<i32>} : memref<10x128xf32, #tpu.memory_space<vmem>>, vector<1x128xf32>,
    %c0_15 = arith.constant 0 : index
    %c0_16 = arith.constant 0 : index
    %20 = vector.load %arg6[%c0_15, %c0_16] : memref<16x32xf32, #tpu.memory_space<vmem>>, vector<16x32xf32>
    %c0_17 = arith.constant 0 : index
    %c0_18 = arith.constant 0 : index
    %21 = vector.load %arg4[%c0_17, %c0_18] : memref<16x32xf32, #tpu.memory_space<vmem>>, vector<16x32xf32>
    %c0_19 = arith.constant 0 : index
    %c0_20 = arith.constant 0 : index
    %22 = vector.load %arg1[%c0_19, %c0_20] : memref<16x16xf32, #tpu.memory_space<vmem>>, vector<16x16xf32>
    %c0_21 = arith.constant 0 : index
    %c0_22 = arith.constant 0 : index
    %23 = vector.load %arg5[%c0_21, %c0_22] : memref<32x32xf32, #tpu.memory_space<vmem>>, vector<32x32xf32>
    %cst_23 = arith.constant dense<0.000000e+00> : vector<16x32xf32>
    %24 = tpu.matmul %22, %21, %cst_23 {dimension_numbers = #tpu.dot_dimension_numbers<[1], [0], [0], [1], [0, 0, 1, 1], [], []>} : vector<16x16xf32>, vector<16x32xf32>, vector<16x32xf32> -> vector<16x32xf32>
    %cst_24 = arith.constant dense<0.000000e+00> : vector<16x32xf32>
    %25 = tpu.matmul %24, %23, %cst_24 {dimension_numbers = #tpu.dot_dimension_numbers<[1], [0], [0], [1], [0, 0, 1, 1], [], []>} : vector<16x32xf32>, vector<32x32xf32>, vector<16x32xf32> -> vector<16x32xf32>
    %26 = arith.subf %25, %20 : vector<16x32xf32>
    %27 = math.absf %26 : vector<16x32xf32>
    %28 = vector.shape_cast %27 : vector<16x32xf32> to vector<1x16x32xf32>
    %cst_25 = arith.constant dense<0.000000e+00> : vector<1xf32>
    %29 = vector.multi_reduction <add>, %28, %cst_25 [1, 2] : vector<1x16x32xf32> to vector<1xf32>
    %30 = vector.shape_cast %29 : vector<1xf32> to vector<1x1x1xf32>
    %31 = vector.extract %30[0, 0, 0] : f32 from vector<1x1x1xf32>
    %32 = vector.broadcast %31 : f32 to vector<1x1xf32>
    %cst_26 = arith.constant 0.001953125 : f32
    %33 = vector.broadcast %cst_26 : f32 to vector<1x1xf32>
    %34 = arith.mulf %32, %33 : vector<1x1xf32>
    %35 = vector.shape_cast %34 : vector<1x1xf32> to vector<1x1xf32>
    %36 = vector.broadcast %35 : vector<1x1xf32> to vector<1x128xf32>
    %c1 = arith.constant 1 : index
    %c0_27 = arith.constant 0 : index
    %37 = vector.load %arg24[%c1, %c0_27] : memref<10x128xf32, #tpu.memory_space<vmem>>, vector<1x128xf32>
    tpu.vector_store %arg24[%c1, %c0_27], %36 {strides = array<i32>} : memref<10x128xf32, #tpu.memory_space<vmem>>, vector<1x128xf32>,
    %c0_28 = arith.constant 0 : index
    %c0_29 = arith.constant 0 : index
    %38 = vector.load %arg3[%c0_28, %c0_29] : memref<16x128xf32, #tpu.memory_space<vmem>>, vector<16x128xf32>
    %c0_30 = arith.constant 0 : index
    %c0_31 = arith.constant 0 : index
    %39 = vector.load %arg7[%c0_30, %c0_31] : memref<8x64xf32, #tpu.memory_space<vmem>>, vector<8x64xf32>
    %c0_32 = arith.constant 0 : index
    %c0_33 = arith.constant 0 : index
    %40 = vector.load %arg8[%c0_32, %c0_33] : memref<16x8xf32, #tpu.memory_space<vmem>>, vector<16x8xf32>
    %c0_34 = arith.constant 0 : index
    %c0_35 = arith.constant 0 : index
    %41 = vector.load %arg9[%c0_34, %c0_35] : memref<64x128xf32, #tpu.memory_space<vmem>>, vector<64x128xf32>
    %cst_36 = arith.constant dense<0.000000e+00> : vector<16x64xf32>
    %42 = tpu.matmul %40, %39, %cst_36 {dimension_numbers = #tpu.dot_dimension_numbers<[1], [0], [0], [1], [0, 0, 1, 1], [], []>} : vector<16x8xf32>, vector<8x64xf32>, vector<16x64xf32> -> vector<16x64xf32>
    %cst_37 = arith.constant dense<0.000000e+00> : vector<16x128xf32>
    %43 = tpu.matmul %42, %41, %cst_37 {dimension_numbers = #tpu.dot_dimension_numbers<[1], [0], [0], [1], [0, 0, 1, 1], [], []>} : vector<16x64xf32>, vector<64x128xf32>, vector<16x128xf32> -> vector<16x128xf32>
    %44 = arith.subf %43, %38 : vector<16x128xf32>
    %45 = math.absf %44 : vector<16x128xf32>
    %46 = vector.shape_cast %45 : vector<16x128xf32> to vector<1x16x128xf32>
    %cst_38 = arith.constant dense<0.000000e+00> : vector<1xf32>
    %47 = vector.multi_reduction <add>, %46, %cst_38 [1, 2] : vector<1x16x128xf32> to vector<1xf32>
    %48 = vector.shape_cast %47 : vector<1xf32> to vector<1x1x1xf32>
    %49 = vector.extract %48[0, 0, 0] : f32 from vector<1x1x1xf32>
    %50 = vector.broadcast %49 : f32 to vector<1x1xf32>
    %cst_39 = arith.constant 4.8828125E-4 : f32
    %51 = vector.broadcast %cst_39 : f32 to vector<1x1xf32>
    %52 = arith.mulf %50, %51 : vector<1x1xf32>
    %53 = vector.shape_cast %52 : vector<1x1xf32> to vector<1x1xf32>
    %54 = vector.broadcast %53 : vector<1x1xf32> to vector<1x128xf32>
    %c2 = arith.constant 2 : index
    %c0_40 = arith.constant 0 : index
    %55 = vector.load %arg24[%c2, %c0_40] : memref<10x128xf32, #tpu.memory_space<vmem>>, vector<1x128xf32>
    tpu.vector_store %arg24[%c2, %c0_40], %54 {strides = array<i32>} : memref<10x128xf32, #tpu.memory_space<vmem>>, vector<1x128xf32>,
    %c0_41 = arith.constant 0 : index
    %c0_42 = arith.constant 0 : index
    %56 = vector.load %arg6[%c0_41, %c0_42] : memref<16x32xf32, #tpu.memory_space<vmem>>, vector<16x32xf32>
    %c0_43 = arith.constant 0 : index
    %c0_44 = arith.constant 0 : index
    %57 = vector.load %arg10[%c0_43, %c0_44] : memref<8x16xf32, #tpu.memory_space<vmem>>, vector<8x16xf32>
    %c0_45 = arith.constant 0 : index
    %c0_46 = arith.constant 0 : index
    %58 = vector.load %arg8[%c0_45, %c0_46] : memref<16x8xf32, #tpu.memory_space<vmem>>, vector<16x8xf32>
    %c0_47 = arith.constant 0 : index
    %c0_48 = arith.constant 0 : index
    %59 = vector.load %arg11[%c0_47, %c0_48] : memref<16x32xf32, #tpu.memory_space<vmem>>, vector<16x32xf32>
    %cst_49 = arith.constant dense<0.000000e+00> : vector<16x16xf32>
    %60 = tpu.matmul %58, %57, %cst_49 {dimension_numbers = #tpu.dot_dimension_numbers<[1], [0], [0], [1], [0, 0, 1, 1], [], []>} : vector<16x8xf32>, vector<8x16xf32>, vector<16x16xf32> -> vector<16x16xf32>
    %cst_50 = arith.constant dense<0.000000e+00> : vector<16x32xf32>
    %61 = tpu.matmul %60, %59, %cst_50 {dimension_numbers = #tpu.dot_dimension_numbers<[1], [0], [0], [1], [0, 0, 1, 1], [], []>} : vector<16x16xf32>, vector<16x32xf32>, vector<16x32xf32> -> vector<16x32xf32>
    %62 = arith.subf %61, %56 : vector<16x32xf32>
    %63 = math.absf %62 : vector<16x32xf32>
    %64 = vector.shape_cast %63 : vector<16x32xf32> to vector<1x16x32xf32>
    %cst_51 = arith.constant dense<0.000000e+00> : vector<1xf32>
    %65 = vector.multi_reduction <add>, %64, %cst_51 [1, 2] : vector<1x16x32xf32> to vector<1xf32>
    %66 = vector.shape_cast %65 : vector<1xf32> to vector<1x1x1xf32>
    %67 = vector.extract %66[0, 0, 0] : f32 from vector<1x1x1xf32>
    %68 = vector.broadcast %67 : f32 to vector<1x1xf32>
    %cst_52 = arith.constant 0.001953125 : f32
    %69 = vector.broadcast %cst_52 : f32 to vector<1x1xf32>
    %70 = arith.mulf %68, %69 : vector<1x1xf32>
    %71 = vector.shape_cast %70 : vector<1x1xf32> to vector<1x1xf32>
    %72 = vector.broadcast %71 : vector<1x1xf32> to vector<1x128xf32>
    %c3 = arith.constant 3 : index
    %c0_53 = arith.constant 0 : index
    %73 = vector.load %arg24[%c3, %c0_53] : memref<10x128xf32, #tpu.memory_space<vmem>>, vector<1x128xf32>
    tpu.vector_store %arg24[%c3, %c0_53], %72 {strides = array<i32>} : memref<10x128xf32, #tpu.memory_space<vmem>>, vector<1x128xf32>,
    %c0_54 = arith.constant 0 : index
    %c0_55 = arith.constant 0 : index
    %74 = vector.load %arg3[%c0_54, %c0_55] : memref<16x128xf32, #tpu.memory_space<vmem>>, vector<16x128xf32>
    %c0_56 = arith.constant 0 : index
    %c0_57 = arith.constant 0 : index
    %75 = vector.load %arg12[%c0_56, %c0_57] : memref<4x32xf32, #tpu.memory_space<vmem>>, vector<4x32xf32>
    %c0_58 = arith.constant 0 : index
    %c0_59 = arith.constant 0 : index
    %76 = vector.load %arg13[%c0_58, %c0_59] : memref<16x4xf32, #tpu.memory_space<vmem>>, vector<16x4xf32>
    %c0_60 = arith.constant 0 : index
    %c0_61 = arith.constant 0 : index
    %77 = vector.load %arg14[%c0_60, %c0_61] : memref<32x128xf32, #tpu.memory_space<vmem>>, vector<32x128xf32>
    %cst_62 = arith.constant dense<0.000000e+00> : vector<16x32xf32>
    %78 = tpu.matmul %76, %75, %cst_62 {dimension_numbers = #tpu.dot_dimension_numbers<[1], [0], [0], [1], [0, 0, 1, 1], [], []>} : vector<16x4xf32>, vector<4x32xf32>, vector<16x32xf32> -> vector<16x32xf32>
    %cst_63 = arith.constant dense<0.000000e+00> : vector<16x128xf32>
    %79 = tpu.matmul %78, %77, %cst_63 {dimension_numbers = #tpu.dot_dimension_numbers<[1], [0], [0], [1], [0, 0, 1, 1], [], []>} : vector<16x32xf32>, vector<32x128xf32>, vector<16x128xf32> -> vector<16x128xf32>
    %80 = arith.subf %79, %74 : vector<16x128xf32>
    %81 = math.absf %80 : vector<16x128xf32>
    %82 = vector.shape_cast %81 : vector<16x128xf32> to vector<1x16x128xf32>
    %cst_64 = arith.constant dense<0.000000e+00> : vector<1xf32>
    %83 = vector.multi_reduction <add>, %82, %cst_64 [1, 2] : vector<1x16x128xf32> to vector<1xf32>
    %84 = vector.shape_cast %83 : vector<1xf32> to vector<1x1x1xf32>
    %85 = vector.extract %84[0, 0, 0] : f32 from vector<1x1x1xf32>
    %86 = vector.broadcast %85 : f32 to vector<1x1xf32>
    %cst_65 = arith.constant 4.8828125E-4 : f32
    %87 = vector.broadcast %cst_65 : f32 to vector<1x1xf32>
    %88 = arith.mulf %86, %87 : vector<1x1xf32>
    %89 = vector.shape_cast %88 : vector<1x1xf32> to vector<1x1xf32>
    %90 = vector.broadcast %89 : vector<1x1xf32> to vector<1x128xf32>
    %c4 = arith.constant 4 : index
    %c0_66 = arith.constant 0 : index
    %91 = vector.load %arg24[%c4, %c0_66] : memref<10x128xf32, #tpu.memory_space<vmem>>, vector<1x128xf32>
    tpu.vector_store %arg24[%c4, %c0_66], %90 {strides = array<i32>} : memref<10x128xf32, #tpu.memory_space<vmem>>, vector<1x128xf32>,
    %c0_67 = arith.constant 0 : index
    %c0_68 = arith.constant 0 : index
    %92 = vector.load %arg6[%c0_67, %c0_68] : memref<16x32xf32, #tpu.memory_space<vmem>>, vector<16x32xf32>
    %c0_69 = arith.constant 0 : index
    %c0_70 = arith.constant 0 : index
    %93 = vector.load %arg15[%c0_69, %c0_70] : memref<4x8xf32, #tpu.memory_space<vmem>>, vector<4x8xf32>
    %c0_71 = arith.constant 0 : index
    %c0_72 = arith.constant 0 : index
    %94 = vector.load %arg13[%c0_71, %c0_72] : memref<16x4xf32, #tpu.memory_space<vmem>>, vector<16x4xf32>
    %c0_73 = arith.constant 0 : index
    %c0_74 = arith.constant 0 : index
    %95 = vector.load %arg16[%c0_73, %c0_74] : memref<8x32xf32, #tpu.memory_space<vmem>>, vector<8x32xf32>
    %cst_75 = arith.constant dense<0.000000e+00> : vector<16x8xf32>
    %96 = tpu.matmul %94, %93, %cst_75 {dimension_numbers = #tpu.dot_dimension_numbers<[1], [0], [0], [1], [0, 0, 1, 1], [], []>} : vector<16x4xf32>, vector<4x8xf32>, vector<16x8xf32> -> vector<16x8xf32>
    %cst_76 = arith.constant dense<0.000000e+00> : vector<16x32xf32>
    %97 = tpu.matmul %96, %95, %cst_76 {dimension_numbers = #tpu.dot_dimension_numbers<[1], [0], [0], [1], [0, 0, 1, 1], [], []>} : vector<16x8xf32>, vector<8x32xf32>, vector<16x32xf32> -> vector<16x32xf32>
    %98 = arith.subf %97, %92 : vector<16x32xf32>
    %99 = math.absf %98 : vector<16x32xf32>
    %100 = vector.shape_cast %99 : vector<16x32xf32> to vector<1x16x32xf32>
    %cst_77 = arith.constant dense<0.000000e+00> : vector<1xf32>
    %101 = vector.multi_reduction <add>, %100, %cst_77 [1, 2] : vector<1x16x32xf32> to vector<1xf32>
    %102 = vector.shape_cast %101 : vector<1xf32> to vector<1x1x1xf32>
    %103 = vector.extract %102[0, 0, 0] : f32 from vector<1x1x1xf32>
    %104 = vector.broadcast %103 : f32 to vector<1x1xf32>
    %cst_78 = arith.constant 0.001953125 : f32
    %105 = vector.broadcast %cst_78 : f32 to vector<1x1xf32>
    %106 = arith.mulf %104, %105 : vector<1x1xf32>
    %107 = vector.shape_cast %106 : vector<1x1xf32> to vector<1x1xf32>
    %108 = vector.broadcast %107 : vector<1x1xf32> to vector<1x128xf32>
    %c5 = arith.constant 5 : index
    %c0_79 = arith.constant 0 : index
    %109 = vector.load %arg24[%c5, %c0_79] : memref<10x128xf32, #tpu.memory_space<vmem>>, vector<1x128xf32>
    tpu.vector_store %arg24[%c5, %c0_79], %108 {strides = array<i32>} : memref<10x128xf32, #tpu.memory_space<vmem>>, vector<1x128xf32>,
    %c0_80 = arith.constant 0 : index
    %c0_81 = arith.constant 0 : index
    %110 = vector.load %arg3[%c0_80, %c0_81] : memref<16x128xf32, #tpu.memory_space<vmem>>, vector<16x128xf32>
    %c0_82 = arith.constant 0 : index
    %c0_83 = arith.constant 0 : index
    %111 = vector.load %arg17[%c0_82, %c0_83] : memref<2x16xf32, #tpu.memory_space<vmem>>, vector<2x16xf32>
    %c0_84 = arith.constant 0 : index
    %c0_85 = arith.constant 0 : index
    %112 = vector.load %arg18[%c0_84, %c0_85] : memref<16x2xf32, #tpu.memory_space<vmem>>, vector<16x2xf32>
    %c0_86 = arith.constant 0 : index
    %c0_87 = arith.constant 0 : index
    %113 = vector.load %arg19[%c0_86, %c0_87] : memref<16x128xf32, #tpu.memory_space<vmem>>, vector<16x128xf32>
    %cst_88 = arith.constant dense<0.000000e+00> : vector<16x16xf32>
    %114 = tpu.matmul %112, %111, %cst_88 {dimension_numbers = #tpu.dot_dimension_numbers<[1], [0], [0], [1], [0, 0, 1, 1], [], []>} : vector<16x2xf32>, vector<2x16xf32>, vector<16x16xf32> -> vector<16x16xf32>
    %cst_89 = arith.constant dense<0.000000e+00> : vector<16x128xf32>
    %115 = tpu.matmul %114, %113, %cst_89 {dimension_numbers = #tpu.dot_dimension_numbers<[1], [0], [0], [1], [0, 0, 1, 1], [], []>} : vector<16x16xf32>, vector<16x128xf32>, vector<16x128xf32> -> vector<16x128xf32>
    %116 = arith.subf %115, %110 : vector<16x128xf32>
    %117 = math.absf %116 : vector<16x128xf32>
    %118 = vector.shape_cast %117 : vector<16x128xf32> to vector<1x16x128xf32>
    %cst_90 = arith.constant dense<0.000000e+00> : vector<1xf32>
    %119 = vector.multi_reduction <add>, %118, %cst_90 [1, 2] : vector<1x16x128xf32> to vector<1xf32>
    %120 = vector.shape_cast %119 : vector<1xf32> to vector<1x1x1xf32>
    %121 = vector.extract %120[0, 0, 0] : f32 from vector<1x1x1xf32>
    %122 = vector.broadcast %121 : f32 to vector<1x1xf32>
    %cst_91 = arith.constant 4.8828125E-4 : f32
    %123 = vector.broadcast %cst_91 : f32 to vector<1x1xf32>
    %124 = arith.mulf %122, %123 : vector<1x1xf32>
    %125 = vector.shape_cast %124 : vector<1x1xf32> to vector<1x1xf32>
    %126 = vector.broadcast %125 : vector<1x1xf32> to vector<1x128xf32>
    %c6 = arith.constant 6 : index
    %c0_92 = arith.constant 0 : index
    %127 = vector.load %arg24[%c6, %c0_92] : memref<10x128xf32, #tpu.memory_space<vmem>>, vector<1x128xf32>
    tpu.vector_store %arg24[%c6, %c0_92], %126 {strides = array<i32>} : memref<10x128xf32, #tpu.memory_space<vmem>>, vector<1x128xf32>,
    %c0_93 = arith.constant 0 : index
    %c0_94 = arith.constant 0 : index
    %128 = vector.load %arg6[%c0_93, %c0_94] : memref<16x32xf32, #tpu.memory_space<vmem>>, vector<16x32xf32>
    %c0_95 = arith.constant 0 : index
    %c0_96 = arith.constant 0 : index
    %129 = vector.load %arg20[%c0_95, %c0_96] : memref<2x4xf32, #tpu.memory_space<vmem>>, vector<2x4xf32>
    %c0_97 = arith.constant 0 : index
    %c0_98 = arith.constant 0 : index
    %130 = vector.load %arg18[%c0_97, %c0_98] : memref<16x2xf32, #tpu.memory_space<vmem>>, vector<16x2xf32>
    %c0_99 = arith.constant 0 : index
    %c0_100 = arith.constant 0 : index
    %131 = vector.load %arg21[%c0_99, %c0_100] : memref<4x32xf32, #tpu.memory_space<vmem>>, vector<4x32xf32>
    %cst_101 = arith.constant dense<0.000000e+00> : vector<16x4xf32>
    %132 = tpu.matmul %130, %129, %cst_101 {dimension_numbers = #tpu.dot_dimension_numbers<[1], [0], [0], [1], [0, 0, 1, 1], [], []>} : vector<16x2xf32>, vector<2x4xf32>, vector<16x4xf32> -> vector<16x4xf32>
    %cst_102 = arith.constant dense<0.000000e+00> : vector<16x32xf32>
    %133 = tpu.matmul %132, %131, %cst_102 {dimension_numbers = #tpu.dot_dimension_numbers<[1], [0], [0], [1], [0, 0, 1, 1], [], []>} : vector<16x4xf32>, vector<4x32xf32>, vector<16x32xf32> -> vector<16x32xf32>
    %134 = arith.subf %133, %128 : vector<16x32xf32>
    %135 = math.absf %134 : vector<16x32xf32>
    %136 = vector.shape_cast %135 : vector<16x32xf32> to vector<1x16x32xf32>
    %cst_103 = arith.constant dense<0.000000e+00> : vector<1xf32>
    %137 = vector.multi_reduction <add>, %136, %cst_103 [1, 2] : vector<1x16x32xf32> to vector<1xf32>
    %138 = vector.shape_cast %137 : vector<1xf32> to vector<1x1x1xf32>
    %139 = vector.extract %138[0, 0, 0] : f32 from vector<1x1x1xf32>
    %140 = vector.broadcast %139 : f32 to vector<1x1xf32>
    %cst_104 = arith.constant 0.001953125 : f32
    %141 = vector.broadcast %cst_104 : f32 to vector<1x1xf32>
    %142 = arith.mulf %140, %141 : vector<1x1xf32>
    %143 = vector.shape_cast %142 : vector<1x1xf32> to vector<1x1xf32>
    %144 = vector.broadcast %143 : vector<1x1xf32> to vector<1x128xf32>
    %c7 = arith.constant 7 : index
    %c0_105 = arith.constant 0 : index
    %145 = vector.load %arg24[%c7, %c0_105] : memref<10x128xf32, #tpu.memory_space<vmem>>, vector<1x128xf32>
    tpu.vector_store %arg24[%c7, %c0_105], %144 {strides = array<i32>} : memref<10x128xf32, #tpu.memory_space<vmem>>, vector<1x128xf32>,
    %c0_106 = arith.constant 0 : index
    %c0_107 = arith.constant 0 : index
    %146 = vector.load %arg3[%c0_106, %c0_107] : memref<16x128xf32, #tpu.memory_space<vmem>>, vector<16x128xf32>
    %c0_108 = arith.constant 0 : index
    %c0_109 = arith.constant 0 : index
    %147 = vector.load %arg22[%c0_108, %c0_109] : memref<16x128xf32, #tpu.memory_space<vmem>>, vector<16x128xf32>
    %148 = arith.subf %147, %146 : vector<16x128xf32>
    %149 = math.absf %148 : vector<16x128xf32>
    %150 = vector.shape_cast %149 : vector<16x128xf32> to vector<1x16x128xf32>
    %cst_110 = arith.constant dense<0.000000e+00> : vector<1xf32>
    %151 = vector.multi_reduction <add>, %150, %cst_110 [1, 2] : vector<1x16x128xf32> to vector<1xf32>
    %152 = vector.shape_cast %151 : vector<1xf32> to vector<1x1x1xf32>
    %153 = vector.extract %152[0, 0, 0] : f32 from vector<1x1x1xf32>
    %154 = vector.broadcast %153 : f32 to vector<1x1xf32>
    %cst_111 = arith.constant 4.8828125E-4 : f32
    %155 = vector.broadcast %cst_111 : f32 to vector<1x1xf32>
    %156 = arith.mulf %154, %155 : vector<1x1xf32>
    %157 = vector.shape_cast %156 : vector<1x1xf32> to vector<1x1xf32>
    %158 = vector.broadcast %157 : vector<1x1xf32> to vector<1x128xf32>
    %c8 = arith.constant 8 : index
    %c0_112 = arith.constant 0 : index
    %159 = vector.load %arg24[%c8, %c0_112] : memref<10x128xf32, #tpu.memory_space<vmem>>, vector<1x128xf32>
    tpu.vector_store %arg24[%c8, %c0_112], %158 {strides = array<i32>} : memref<10x128xf32, #tpu.memory_space<vmem>>, vector<1x128xf32>,
    %c0_113 = arith.constant 0 : index
    %c0_114 = arith.constant 0 : index
    %160 = vector.load %arg6[%c0_113, %c0_114] : memref<16x32xf32, #tpu.memory_space<vmem>>, vector<16x32xf32>
    %c0_115 = arith.constant 0 : index
    %c0_116 = arith.constant 0 : index
    %161 = vector.load %arg23[%c0_115, %c0_116] : memref<16x32xf32, #tpu.memory_space<vmem>>, vector<16x32xf32>
    %162 = arith.subf %161, %160 : vector<16x32xf32>
    %163 = math.absf %162 : vector<16x32xf32>
    %164 = vector.shape_cast %163 : vector<16x32xf32> to vector<1x16x32xf32>
    %cst_117 = arith.constant dense<0.000000e+00> : vector<1xf32>
    %165 = vector.multi_reduction <add>, %164, %cst_117 [1, 2] : vector<1x16x32xf32> to vector<1xf32>
    %166 = vector.shape_cast %165 : vector<1xf32> to vector<1x1x1xf32>
    %167 = vector.extract %166[0, 0, 0] : f32 from vector<1x1x1xf32>
    %168 = vector.broadcast %167 : f32 to vector<1x1xf32>
    %cst_118 = arith.constant 0.001953125 : f32
    %169 = vector.broadcast %cst_118 : f32 to vector<1x1xf32>
    %170 = arith.mulf %168, %169 : vector<1x1xf32>
    %171 = vector.shape_cast %170 : vector<1x1xf32> to vector<1x1xf32>
    %172 = vector.broadcast %171 : vector<1x1xf32> to vector<1x128xf32>
    %c9 = arith.constant 9 : index
    %c0_119 = arith.constant 0 : index
    %173 = vector.load %arg24[%c9, %c0_119] : memref<10x128xf32, #tpu.memory_space<vmem>>, vector<1x128xf32>
    tpu.vector_store %arg24[%c9, %c0_119], %172 {strides = array<i32>} : memref<10x128xf32, #tpu.memory_space<vmem>>, vector<1x128xf32>,
    return
  }
}

</mosaic_0001>

<llo_original>
// kernel: tpu_custom_call.1
$region0: #{tpu_custom_call.1}
  #allocation0 [shape = 'u32[]', space=smem, size = 0x4, offset = 0x4, fixed_abs, tag = 'smem constant byte address 0x4 - core index']
  #allocation1 [shape = 'u32[72,128]{1,0:T(1,128)}', space=vmem, size = 0x9000, scoped, tag = 'internal scratch']
  %s0 = inlined_call_operand.vmem [shape: f32[16,128], index: 0, kind: input, shape index: {}]
  %s1 = inlined_call_operand.hbm [shape: f32[16,16], index: 1, kind: input, shape index: {}]
  %s2 = inlined_call_operand.hbm [shape: f32[128,128], index: 2, kind: input, shape index: {}]
  %s3 = inlined_call_operand.hbm [shape: f32[16,128], index: 3, kind: input, shape index: {}]
  %s4 = inlined_call_operand.hbm [shape: f32[16,32], index: 4, kind: input, shape index: {}]
  %s5 = inlined_call_operand.vmem [shape: f32[32,32], index: 5, kind: input, shape index: {}]
  %s6 = inlined_call_operand.hbm [shape: f32[16,32], index: 6, kind: input, shape index: {}]
  %s7 = inlined_call_operand.hbm [shape: f32[8,64], index: 7, kind: input, shape index: {}]
  %s8 = inlined_call_operand.vmem [shape: f32[16,8], index: 8, kind: input, shape index: {}]
  %s9 = inlined_call_operand.hbm [shape: f32[64,128], index: 9, kind: input, shape index: {}]
  %s10 = inlined_call_operand.hbm [shape: f32[8,16], index: 10, kind: input, shape index: {}]
  %s11 = inlined_call_operand.vmem [shape: f32[16,32], index: 11, kind: input, shape index: {}]
  %s12 = inlined_call_operand.hbm [shape: f32[4,32], index: 12, kind: input, shape index: {}]
  %s13 = inlined_call_operand.vmem [shape: f32[16,4], index: 13, kind: input, shape index: {}]
  %s14 = inlined_call_operand.hbm [shape: f32[32,128], index: 14, kind: input, shape index: {}]
  %s15 = inlined_call_operand.vmem [shape: f32[4,8], index: 15, kind: input, shape index: {}]
  %s16 = inlined_call_operand.hbm [shape: f32[8,32], index: 16, kind: input, shape index: {}]
  %s17 = inlined_call_operand.vmem [shape: f32[2,16], index: 17, kind: input, shape index: {}]
  %s18 = inlined_call_operand.vmem [shape: f32[16,2], index: 18, kind: input, shape index: {}]
  %s19 = inlined_call_operand.hbm [shape: f32[16,128], index: 19, kind: input, shape index: {}]
  %s20 = inlined_call_operand.hbm [shape: f32[2,4], index: 20, kind: input, shape index: {}]
  %s21 = inlined_call_operand.vmem [shape: f32[4,32], index: 21, kind: input, shape index: {}]
  %s22 = inlined_call_operand.hbm [shape: f32[16,128], index: 22, kind: input, shape index: {}]
  %s23 = inlined_call_operand.hbm [shape: f32[16,32], index: 23, kind: input, shape index: {}]
  %s24 = inlined_call_operand.hbm [shape: f32[10,128], index: 24, kind: output, shape index: {}]
  %s25 = sld [smem:[#allocation0]]
  $region166: #{tpu_custom_call.1} parent=0
    _
  %s27 = ssub.s32 1, %s25
  %s28 = scalar_select 0, %s27, %s25
  $region1: #{tpu_custom_call.1} parent=0
    #allocation2 [shape = 'u8[8192]{0}', space=vmem, size = 0x2000, scoped, tag = 'input window, operand 1, single buffered']
    #allocation3 [shape = 's32[1]{0}', space=sflag, size = 0x4, scoped, tag = 'scoped memory for tpu_custom_call.1']
    #allocation4 [shape = 's32[1]{0}', space=sflag, size = 0x4, scoped, tag = 'scoped memory for tpu_custom_call.1']
    #allocation5 [shape = 'u8[65536]{0}', space=vmem, size = 0x10000, scoped, tag = 'input window, operand 2, single buffered']
    #allocation6 [shape = 's32[1]{0}', space=sflag, size = 0x4, scoped, tag = 'scoped memory for tpu_custom_call.1']
    #allocation7 [shape = 'u8[8192]{0}', space=vmem, size = 0x2000, scoped, tag = 'input window, operand 3, single buffered']
    #allocation8 [shape = 'u8[8192]{0}', space=vmem, size = 0x2000, scoped, tag = 'input window, operand 4, single buffered']
    #allocation9 [shape = 's32[1]{0}', space=sflag, size = 0x4, scoped, tag = 'scoped memory for tpu_custom_call.1']
    #allocation10 [shape = 'u8[8192]{0}', space=vmem, size = 0x2000, scoped, tag = 'input window, operand 6, single buffered']
    #allocation11 [shape = 'u8[4096]{0}', space=vmem, size = 0x1000, scoped, tag = 'input window, operand 7, single buffered']
    #allocation12 [shape = 's32[1]{0}', space=sflag, size = 0x4, scoped, tag = 'scoped memory for tpu_custom_call.1']
    #allocation13 [shape = 'u8[32768]{0}', space=vmem, size = 0x8000, scoped, tag = 'input window, operand 9, single buffered']
    #allocation14 [shape = 'u8[4096]{0}', space=vmem, size = 0x1000, scoped, tag = 'input window, operand 10, single buffered']
    #allocation15 [shape = 's32[1]{0}', space=sflag, size = 0x4, scoped, tag = 'scoped memory for tpu_custom_call.1']
    #allocation16 [shape = 'u8[2048]{0}', space=vmem, size = 0x800, scoped, tag = 'input window, operand 12, single buffered']
    #allocation17 [shape = 'u8[16384]{0}', space=vmem, size = 0x4000, scoped, tag = 'input window, operand 14, single buffered']
    #allocation18 [shape = 's32[1]{0}', space=sflag, size = 0x4, scoped, tag = 'scoped memory for tpu_custom_call.1']
    #allocation19 [shape = 'u8[4096]{0}', space=vmem, size = 0x1000, scoped, tag = 'input window, operand 16, single buffered']
    #allocation20 [shape = 'u8[8192]{0}', space=vmem, size = 0x2000, scoped, tag = 'input window, operand 19, single buffered']
    #allocation21 [shape = 's32[1]{0}', space=sflag, size = 0x4, scoped, tag = 'scoped memory for tpu_custom_call.1']
    #allocation22 [shape = 'u8[1024]{0}', space=vmem, size = 0x400, scoped, tag = 'input window, operand 20, single buffered']
    #allocation23 [shape = 'u8[8192]{0}', space=vmem, size = 0x2000, scoped, tag = 'input window, operand 22, single buffered']
    #allocation24 [shape = 's32[1]{0}', space=sflag, size = 0x4, scoped, tag = 'scoped memory for tpu_custom_call.1']
    #allocation25 [shape = 'u8[8192]{0}', space=vmem, size = 0x2000, scoped, tag = 'input window, operand 23, single buffered']
    #allocation26 [shape = 'u8[8192]{0}', space=vmem, size = 0x2000, scoped, tag = 'output window, operand 0, single buffered']
    %29 = vsyncpa [#allocation3], 0
    %30 = vsyncpa [#allocation6], 0
    %31 = vsyncpa [#allocation9], 0
    %32 = vsyncpa [#allocation12], 0
    %33 = vsyncpa [#allocation15], 0
    %34 = vsyncpa [#allocation18], 0
    %35 = vsyncpa [#allocation21], 0
    %36 = vsyncpa [#allocation24], 0
    %37 = vsyncpa [#allocation4], 0
    // Predicated region
    $region2: #{tpu_custom_call.1} parent=1 // pred_check
      _
    $region3: #{tpu_custom_call.1} parent=1 // pred_check_branch
      %39 = sbr.rel (0) target = $region5
    $region4: #{tpu_custom_call.1} parent=1 // pred_region
      _
    $region5: #{tpu_custom_call.1} parent=1 // pred_fallthru
      _
    // Predicated region
    $region6: #{tpu_custom_call.1} parent=1 // pred_check
      _
    $region7: #{tpu_custom_call.1} parent=1 // pred_check_branch
      %41 = sbr.rel (0) target = $region9
    $region8: #{tpu_custom_call.1} parent=1 // pred_region
      %43 = vsyncadd [#allocation3], 0
      %s44 = sshll.u32 %s1, 4
      %s45 = int_to_ptr.hbm [resolvable:$true] %s44
      %s46 = sshll.u32 [#allocation2], 4
      %s47 = int_to_ptr.vmem [resolvable:$true] %s46
      %52 = dma.hbm_to_vmem [thread:$0]  %s45, 256, %s47, [#allocation3], 128, 128, 8
    $region9: #{tpu_custom_call.1} parent=1 // pred_fallthru
      _
    // Predicated region
    $region10: #{tpu_custom_call.1} parent=1 // pred_check
      _
    $region11: #{tpu_custom_call.1} parent=1 // pred_check_branch
      %54 = sbr.rel (0) target = $region13
    $region12: #{tpu_custom_call.1} parent=1 // pred_region
      %56 = vsyncadd [#allocation6], 0
      %s57 = sshll.u32 %s2, 4
      %s58 = int_to_ptr.hbm [resolvable:$true] %s57
      %s59 = sshll.u32 [#allocation5], 4
      %s60 = int_to_ptr.vmem [resolvable:$true] %s59
      %65 = dma.hbm_to_vmem [thread:$0]  %s58, 2048, %s60, [#allocation6], 128, 128, 8
    $region13: #{tpu_custom_call.1} parent=1 // pred_fallthru
      _
    // Predicated region
    $region14: #{tpu_custom_call.1} parent=1 // pred_check
      _
    $region15: #{tpu_custom_call.1} parent=1 // pred_check_branch
      %67 = sbr.rel (0) target = $region17
    $region16: #{tpu_custom_call.1} parent=1 // pred_region
      %69 = vsyncadd [#allocation6], 0
      %s70 = sshll.u32 %s3, 4
      %s71 = int_to_ptr.hbm [resolvable:$true] %s70
      %s72 = sshll.u32 [#allocation7], 4
      %s73 = int_to_ptr.vmem [resolvable:$true] %s72
      %78 = dma.hbm_to_vmem [thread:$0]  %s71, 256, %s73, [#allocation6], 128, 128, 8
    $region17: #{tpu_custom_call.1} parent=1 // pred_fallthru
      _
    // Predicated region
    $region18: #{tpu_custom_call.1} parent=1 // pred_check
      _
    $region19: #{tpu_custom_call.1} parent=1 // pred_check_branch
      %80 = sbr.rel (0) target = $region21
    $region20: #{tpu_custom_call.1} parent=1 // pred_region
      %82 = vsyncadd [#allocation9], 0
      %s83 = sshll.u32 %s4, 4
      %s84 = int_to_ptr.hbm [resolvable:$true] %s83
      %s85 = sshll.u32 [#allocation8], 4
      %s86 = int_to_ptr.vmem [resolvable:$true] %s85
      %91 = dma.hbm_to_vmem [thread:$0]  %s84, 256, %s86, [#allocation9], 128, 128, 8
    $region21: #{tpu_custom_call.1} parent=1 // pred_fallthru
      _
    // Predicated region
    $region22: #{tpu_custom_call.1} parent=1 // pred_check
      _
    $region23: #{tpu_custom_call.1} parent=1 // pred_check_branch
      %93 = sbr.rel (0) target = $region25
    $region24: #{tpu_custom_call.1} parent=1 // pred_region
      _
    $region25: #{tpu_custom_call.1} parent=1 // pred_fallthru
      _
    // Predicated region
    $region26: #{tpu_custom_call.1} parent=1 // pred_check
      _
    $region27: #{tpu_custom_call.1} parent=1 // pred_check_branch
      %95 = sbr.rel (0) target = $region29
    $region28: #{tpu_custom_call.1} parent=1 // pred_region
      %97 = vsyncadd [#allocation9], 0
      %s98 = sshll.u32 %s6, 4
      %s99 = int_to_ptr.hbm [resolvable:$true] %s98
      %s100 = sshll.u32 [#allocation10], 4
      %s101 = int_to_ptr.vmem [resolvable:$true] %s100
      %106 = dma.hbm_to_vmem [thread:$0]  %s99, 256, %s101, [#allocation9], 128, 128, 8
    $region29: #{tpu_custom_call.1} parent=1 // pred_fallthru
      _
    // Predicated region
    $region30: #{tpu_custom_call.1} parent=1 // pred_check
      _
    $region31: #{tpu_custom_call.1} parent=1 // pred_check_branch
      %108 = sbr.rel (0) target = $region33
    $region32: #{tpu_custom_call.1} parent=1 // pred_region
      %110 = vsyncadd [#allocation12], 0
      %s112 = sshll.u32 %s7, 4
      %s113 = int_to_ptr.hbm [resolvable:$true] %s112
      %s114 = sshll.u32 [#allocation11], 4
      %s115 = int_to_ptr.vmem [resolvable:$true] %s114
      %117 = dma.hbm_to_vmem [thread:$0]  %s113, 128, %s115, [#allocation12]
    $region33: #{tpu_custom_call.1} parent=1 // pred_fallthru
      _
    // Predicated region
    $region34: #{tpu_custom_call.1} parent=1 // pred_check
      _
    $region35: #{tpu_custom_call.1} parent=1 // pred_check_branch
      %119 = sbr.rel (0) target = $region37
    $region36: #{tpu_custom_call.1} parent=1 // pred_region
      _
    $region37: #{tpu_custom_call.1} parent=1 // pred_fallthru
      _
    // Predicated region
    $region38: #{tpu_custom_call.1} parent=1 // pred_check
      _
    $region39: #{tpu_custom_call.1} parent=1 // pred_check_branch
      %121 = sbr.rel (0) target = $region41
    $region40: #{tpu_custom_call.1} parent=1 // pred_region
      %123 = vsyncadd [#allocation12], 0
      %s124 = sshll.u32 %s9, 4
      %s125 = int_to_ptr.hbm [resolvable:$true] %s124
      %s126 = sshll.u32 [#allocation13], 4
      %s127 = int_to_ptr.vmem [resolvable:$true] %s126
      %132 = dma.hbm_to_vmem [thread:$0]  %s125, 1024, %s127, [#allocation12], 128, 128, 8
    $region41: #{tpu_custom_call.1} parent=1 // pred_fallthru
      _
    // Predicated region
    $region42: #{tpu_custom_call.1} parent=1 // pred_check
      _
    $region43: #{tpu_custom_call.1} parent=1 // pred_check_branch
      %134 = sbr.rel (0) target = $region45
    $region44: #{tpu_custom_call.1} parent=1 // pred_region
      %136 = vsyncadd [#allocation15], 0
      %s138 = sshll.u32 %s10, 4
      %s139 = int_to_ptr.hbm [resolvable:$true] %s138
      %s140 = sshll.u32 [#allocation14], 4
      %s141 = int_to_ptr.vmem [resolvable:$true] %s140
      %143 = dma.hbm_to_vmem [thread:$0]  %s139, 128, %s141, [#allocation15]
    $region45: #{tpu_custom_call.1} parent=1 // pred_fallthru
      _
    // Predicated region
    $region46: #{tpu_custom_call.1} parent=1 // pred_check
      _
    $region47: #{tpu_custom_call.1} parent=1 // pred_check_branch
      %145 = sbr.rel (0) target = $region49
    $region48: #{tpu_custom_call.1} parent=1 // pred_region
      _
    $region49: #{tpu_custom_call.1} parent=1 // pred_fallthru
      _
    // Predicated region
    $region50: #{tpu_custom_call.1} parent=1 // pred_check
      _
    $region51: #{tpu_custom_call.1} parent=1 // pred_check_branch
      %147 = sbr.rel (0) target = $region53
    $region52: #{tpu_custom_call.1} parent=1 // pred_region
      %149 = vsyncadd [#allocation15], 0
      %s151 = sshll.u32 %s12, 4
      %s152 = int_to_ptr.hbm [resolvable:$true] %s151
      %s153 = sshll.u32 [#allocation16], 4
      %s154 = int_to_ptr.vmem [resolvable:$true] %s153
      %156 = dma.hbm_to_vmem [thread:$0]  %s152, 64, %s154, [#allocation15]
    $region53: #{tpu_custom_call.1} parent=1 // pred_fallthru
      _
    // Predicated region
    $region54: #{tpu_custom_call.1} parent=1 // pred_check
      _
    $region55: #{tpu_custom_call.1} parent=1 // pred_check_branch
      %158 = sbr.rel (0) target = $region57
    $region56: #{tpu_custom_call.1} parent=1 // pred_region
      _
    $region57: #{tpu_custom_call.1} parent=1 // pred_fallthru
      _
    // Predicated region
    $region58: #{tpu_custom_call.1} parent=1 // pred_check
      _
    $region59: #{tpu_custom_call.1} parent=1 // pred_check_branch
      %160 = sbr.rel (0) target = $region61
    $region60: #{tpu_custom_call.1} parent=1 // pred_region
      %162 = vsyncadd [#allocation18], 0
      %s163 = sshll.u32 %s14, 4
      %s164 = int_to_ptr.hbm [resolvable:$true] %s163
      %s165 = sshll.u32 [#allocation17], 4
      %s166 = int_to_ptr.vmem [resolvable:$true] %s165
      %171 = dma.hbm_to_vmem [thread:$0]  %s164, 512, %s166, [#allocation18], 128, 128, 8
    $region61: #{tpu_custom_call.1} parent=1 // pred_fallthru
      _
    // Predicated region
    $region62: #{tpu_custom_call.1} parent=1 // pred_check
      _
    $region63: #{tpu_custom_call.1} parent=1 // pred_check_branch
      %173 = sbr.rel (0) target = $region65
    $region64: #{tpu_custom_call.1} parent=1 // pred_region
      _
    $region65: #{tpu_custom_call.1} parent=1 // pred_fallthru
      _
    // Predicated region
    $region66: #{tpu_custom_call.1} parent=1 // pred_check
      _
    $region67: #{tpu_custom_call.1} parent=1 // pred_check_branch
      %175 = sbr.rel (0) target = $region69
    $region68: #{tpu_custom_call.1} parent=1 // pred_region
      %177 = vsyncadd [#allocation18], 0
      %s179 = sshll.u32 %s16, 4
      %s180 = int_to_ptr.hbm [resolvable:$true] %s179
      %s181 = sshll.u32 [#allocation19], 4
      %s182 = int_to_ptr.vmem [resolvable:$true] %s181
      %184 = dma.hbm_to_vmem [thread:$0]  %s180, 128, %s182, [#allocation18]
    $region69: #{tpu_custom_call.1} parent=1 // pred_fallthru
      _
    // Predicated region
    $region70: #{tpu_custom_call.1} parent=1 // pred_check
      _
    $region71: #{tpu_custom_call.1} parent=1 // pred_check_branch
      %186 = sbr.rel (0) target = $region73
    $region72: #{tpu_custom_call.1} parent=1 // pred_region
      _
    $region73: #{tpu_custom_call.1} parent=1 // pred_fallthru
      _
    // Predicated region
    $region74: #{tpu_custom_call.1} parent=1 // pred_check
      _
    $region75: #{tpu_custom_call.1} parent=1 // pred_check_branch
      %188 = sbr.rel (0) target = $region77
    $region76: #{tpu_custom_call.1} parent=1 // pred_region
      _
    $region77: #{tpu_custom_call.1} parent=1 // pred_fallthru
      _
    // Predicated region
    $region78: #{tpu_custom_call.1} parent=1 // pred_check
      _
    $region79: #{tpu_custom_call.1} parent=1 // pred_check_branch
      %190 = sbr.rel (0) target = $region81
    $region80: #{tpu_custom_call.1} parent=1 // pred_region
      %192 = vsyncadd [#allocation21], 0
      %s193 = sshll.u32 %s19, 4
      %s194 = int_to_ptr.hbm [resolvable:$true] %s193
      %s195 = sshll.u32 [#allocation20], 4
      %s196 = int_to_ptr.vmem [resolvable:$true] %s195
      %201 = dma.hbm_to_vmem [thread:$0]  %s194, 256, %s196, [#allocation21], 128, 128, 8
    $region81: #{tpu_custom_call.1} parent=1 // pred_fallthru
      _
    // Predicated region
    $region82: #{tpu_custom_call.1} parent=1 // pred_check
      _
    $region83: #{tpu_custom_call.1} parent=1 // pred_check_branch
      %203 = sbr.rel (0) target = $region85
    $region84: #{tpu_custom_call.1} parent=1 // pred_region
      %205 = vsyncadd [#allocation21], 0
      %s207 = sshll.u32 %s20, 4
      %s208 = int_to_ptr.hbm [resolvable:$true] %s207
      %s209 = sshll.u32 [#allocation22], 4
      %s210 = int_to_ptr.vmem [resolvable:$true] %s209
      %212 = dma.hbm_to_vmem [thread:$0]  %s208, 32, %s210, [#allocation21]
    $region85: #{tpu_custom_call.1} parent=1 // pred_fallthru
      _
    // Predicated region
    $region86: #{tpu_custom_call.1} parent=1 // pred_check
      _
    $region87: #{tpu_custom_call.1} parent=1 // pred_check_branch
      %214 = sbr.rel (0) target = $region89
    $region88: #{tpu_custom_call.1} parent=1 // pred_region
      _
    $region89: #{tpu_custom_call.1} parent=1 // pred_fallthru
      _
    // Predicated region
    $region90: #{tpu_custom_call.1} parent=1 // pred_check
      _
    $region91: #{tpu_custom_call.1} parent=1 // pred_check_branch
      %216 = sbr.rel (0) target = $region93
    $region92: #{tpu_custom_call.1} parent=1 // pred_region
      %218 = vsyncadd [#allocation24], 0
      %s219 = sshll.u32 %s22, 4
      %s220 = int_to_ptr.hbm [resolvable:$true] %s219
      %s221 = sshll.u32 [#allocation23], 4
      %s222 = int_to_ptr.vmem [resolvable:$true] %s221
      %227 = dma.hbm_to_vmem [thread:$0]  %s220, 256, %s222, [#allocation24], 128, 128, 8
    $region93: #{tpu_custom_call.1} parent=1 // pred_fallthru
      _
    // Predicated region
    $region94: #{tpu_custom_call.1} parent=1 // pred_check
      _
    $region95: #{tpu_custom_call.1} parent=1 // pred_check_branch
      %229 = sbr.rel (0) target = $region97
    $region96: #{tpu_custom_call.1} parent=1 // pred_region
      %231 = vsyncadd [#allocation24], 0
      %s232 = sshll.u32 %s23, 4
      %s233 = int_to_ptr.hbm [resolvable:$true] %s232
      %s234 = sshll.u32 [#allocation25], 4
      %s235 = int_to_ptr.vmem [resolvable:$true] %s234
      %240 = dma.hbm_to_vmem [thread:$0]  %s233, 256, %s235, [#allocation24], 128, 128, 8
    $region97: #{tpu_custom_call.1} parent=1 // pred_fallthru
      _
    // Predicated region
    $region98: #{tpu_custom_call.1} parent=1 // pred_check
      _
    $region99: #{tpu_custom_call.1} parent=1 // pred_check_branch
      %242 = sbr.rel (0) target = $region101
    $region100: #{tpu_custom_call.1} parent=1 // pred_region
      %244 = dma.done [#allocation3], 256
    $region101: #{tpu_custom_call.1} parent=1 // pred_fallthru
      _
    // Predicated region
    $region102: #{tpu_custom_call.1} parent=1 // pred_check
      _
    $region103: #{tpu_custom_call.1} parent=1 // pred_check_branch
      %246 = sbr.rel (0) target = $region105
    $region104: #{tpu_custom_call.1} parent=1 // pred_region
      %248 = dma.done [#allocation6], 2048
    $region105: #{tpu_custom_call.1} parent=1 // pred_fallthru
      _
    // Predicated region
    $region106: #{tpu_custom_call.1} parent=1 // pred_check
      _
    $region107: #{tpu_custom_call.1} parent=1 // pred_check_branch
      %250 = sbr.rel (0) target = $region109
    $region108: #{tpu_custom_call.1} parent=1 // pred_region
      %252 = dma.done [#allocation6], 256
    $region109: #{tpu_custom_call.1} parent=1 // pred_fallthru
      _
    // Predicated region
    $region110: #{tpu_custom_call.1} parent=1 // pred_check
      _
    $region111: #{tpu_custom_call.1} parent=1 // pred_check_branch
      %254 = sbr.rel (0) target = $region113
    $region112: #{tpu_custom_call.1} parent=1 // pred_region
      %256 = dma.done [#allocation9], 256
    $region113: #{tpu_custom_call.1} parent=1 // pred_fallthru
      _
    // Predicated region
    $region114: #{tpu_custom_call.1} parent=1 // pred_check
      _
    $region115: #{tpu_custom_call.1} parent=1 // pred_check_branch
      %258 = sbr.rel (0) target = $region117
    $region116: #{tpu_custom_call.1} parent=1 // pred_region
      %260 = dma.done [#allocation9], 256
    $region117: #{tpu_custom_call.1} parent=1 // pred_fallthru
      _
    // Predicated region
    $region118: #{tpu_custom_call.1} parent=1 // pred_check
      _
    $region119: #{tpu_custom_call.1} parent=1 // pred_check_branch
      %262 = sbr.rel (0) target = $region121
    $region120: #{tpu_custom_call.1} parent=1 // pred_region
      %264 = dma.done [#allocation12], 128
    $region121: #{tpu_custom_call.1} parent=1 // pred_fallthru
      _
    // Predicated region
    $region122: #{tpu_custom_call.1} parent=1 // pred_check
      _
    $region123: #{tpu_custom_call.1} parent=1 // pred_check_branch
      %266 = sbr.rel (0) target = $region125
    $region124: #{tpu_custom_call.1} parent=1 // pred_region
      %268 = dma.done [#allocation12], 1024
    $region125: #{tpu_custom_call.1} parent=1 // pred_fallthru
      _
    // Predicated region
    $region126: #{tpu_custom_call.1} parent=1 // pred_check
      _
    $region127: #{tpu_custom_call.1} parent=1 // pred_check_branch
      %270 = sbr.rel (0) target = $region129
    $region128: #{tpu_custom_call.1} parent=1 // pred_region
      %272 = dma.done [#allocation15], 128
    $region129: #{tpu_custom_call.1} parent=1 // pred_fallthru
      _
    // Predicated region
    $region130: #{tpu_custom_call.1} parent=1 // pred_check
      _
    $region131: #{tpu_custom_call.1} parent=1 // pred_check_branch
      %274 = sbr.rel (0) target = $region133
    $region132: #{tpu_custom_call.1} parent=1 // pred_region
      %276 = dma.done [#allocation15], 64
    $region133: #{tpu_custom_call.1} parent=1 // pred_fallthru
      _
    // Predicated region
    $region134: #{tpu_custom_call.1} parent=1 // pred_check
      _
    $region135: #{tpu_custom_call.1} parent=1 // pred_check_branch
      %278 = sbr.rel (0) target = $region137
    $region136: #{tpu_custom_call.1} parent=1 // pred_region
      %280 = dma.done [#allocation18], 512
    $region137: #{tpu_custom_call.1} parent=1 // pred_fallthru
      _
    // Predicated region
    $region138: #{tpu_custom_call.1} parent=1 // pred_check
      _
    $region139: #{tpu_custom_call.1} parent=1 // pred_check_branch
      %282 = sbr.rel (0) target = $region141
    $region140: #{tpu_custom_call.1} parent=1 // pred_region
      %284 = dma.done [#allocation18], 128
    $region141: #{tpu_custom_call.1} parent=1 // pred_fallthru
      _
    // Predicated region
    $region142: #{tpu_custom_call.1} parent=1 // pred_check
      _
    $region143: #{tpu_custom_call.1} parent=1 // pred_check_branch
      %286 = sbr.rel (0) target = $region145
    $region144: #{tpu_custom_call.1} parent=1 // pred_region
      %288 = dma.done [#allocation21], 256
    $region145: #{tpu_custom_call.1} parent=1 // pred_fallthru
      _
    // Predicated region
    $region146: #{tpu_custom_call.1} parent=1 // pred_check
      _
    $region147: #{tpu_custom_call.1} parent=1 // pred_check_branch
      %290 = sbr.rel (0) target = $region149
    $region148: #{tpu_custom_call.1} parent=1 // pred_region
      %292 = dma.done [#allocation21], 32
    $region149: #{tpu_custom_call.1} parent=1 // pred_fallthru
      _
    // Predicated region
    $region150: #{tpu_custom_call.1} parent=1 // pred_check
      _
    $region151: #{tpu_custom_call.1} parent=1 // pred_check_branch
      %294 = sbr.rel (0) target = $region153
    $region152: #{tpu_custom_call.1} parent=1 // pred_region
      %296 = dma.done [#allocation24], 256
    $region153: #{tpu_custom_call.1} parent=1 // pred_fallthru
      _
    // Predicated region
    $region154: #{tpu_custom_call.1} parent=1 // pred_check
      _
    $region155: #{tpu_custom_call.1} parent=1 // pred_check_branch
      %298 = sbr.rel (0) target = $region157
    $region156: #{tpu_custom_call.1} parent=1 // pred_region
      %300 = dma.done [#allocation24], 256
    $region157: #{tpu_custom_call.1} parent=1 // pred_fallthru
      _
    %301 = vst [vmem:[#allocation26] sm:$0xff] 0.0
    %302 = vst [vmem:[#allocation26 + $0x8] sm:$0x3] 0.0
    %v303 = vld [vmem:[#allocation7] sm:$0xff]
    %v304 = vld [vmem:[#allocation7 + $0x8] sm:$0xff]
    %v305 = vld [vmem:[%s0] sm:$0xff]
    %v306 = vld [vmem:[%s0 + $0x8] sm:$0xff]
    %v307 = vld [vmem:[#allocation2] sm:$0xff]
    %v308 = vld [vmem:[#allocation2 + $0x8] sm:$0xff]
    %v309 = vld [vmem:[#allocation5] sm:$0xff]
    %v310 = vld [vmem:[#allocation5 + $0x8] sm:$0xff]
    %v311 = vld [vmem:[#allocation5 + $0x10] sm:$0xff]
    %v312 = vld [vmem:[#allocation5 + $0x18] sm:$0xff]
    %v313 = vld [vmem:[#allocation5 + $0x20] sm:$0xff]
    %v314 = vld [vmem:[#allocation5 + $0x28] sm:$0xff]
    %v315 = vld [vmem:[#allocation5 + $0x30] sm:$0xff]
    %v316 = vld [vmem:[#allocation5 + $0x38] sm:$0xff]
    %v317 = vld [vmem:[#allocation5 + $0x40] sm:$0xff]
    %v318 = vld [vmem:[#allocation5 + $0x48] sm:$0xff]
    %v319 = vld [vmem:[#allocation5 + $0x50] sm:$0xff]
    %v320 = vld [vmem:[#allocation5 + $0x58] sm:$0xff]
    %v321 = vld [vmem:[#allocation5 + $0x60] sm:$0xff]
    %v322 = vld [vmem:[#allocation5 + $0x68] sm:$0xff]
    %v323 = vld [vmem:[#allocation5 + $0x70] sm:$0xff]
    %v324 = vld [vmem:[#allocation5 + $0x78] sm:$0xff]
    %vm325 = vcmask 130048
    %v327 = vsel %vm325, %v307, 0
    %v330 = vsel %vm325, %v308, 0
    %332 = vmatpush.msra.mxu0 0.0
    %333 = vmatpush.msra.mxu0 0.0
    %334 = vmatpush.msra.mxu0 0.0
    %335 = vmatpush.msra.mxu0 0.0
    %336 = vmatpush.msra.mxu0 0.0
    %337 = vmatpush.msra.mxu0 0.0
    %338 = vmatpush.msra.mxu0 0.0
    %339 = vmatpush.msra.mxu0 0.0
    %340 = vmatpush.msra.mxu0 0.0
    %341 = vmatpush.msra.mxu0 0.0
    %342 = vmatpush.msra.mxu0 0.0
    %343 = vmatpush.msra.mxu0 0.0
    %344 = vmatpush.msra.mxu0 0.0
    %345 = vmatpush.msra.mxu0 0.0
    %346 = vmatpush.msra.mxu0 %v306
    %347 = vmatpush.msra.mxu0 %v305
    %348 = vmatmul.f32.gmra.mxu0 %v327
    %v349 = vpop.f32.mrf.mxu0
    %v350 = vadd.f32 0.0, %v349
    %351 = vmatmul.f32.gmra.mxu0 %v330
    %v352 = vpop.f32.mrf.mxu0
    %v353 = vadd.f32 0.0, %v352
    %354 = vdwg.mxu0
    %355 = vmatpush.msra.mxu0 %v324
    %356 = vmatpush.msra.mxu0 %v323
    %357 = vmatpush.msra.mxu0 %v322
    %358 = vmatpush.msra.mxu0 %v321
    %359 = vmatpush.msra.mxu0 %v320
    %360 = vmatpush.msra.mxu0 %v319
    %361 = vmatpush.msra.mxu0 %v318
    %362 = vmatpush.msra.mxu0 %v317
    %363 = vmatpush.msra.mxu0 %v316
    %364 = vmatpush.msra.mxu0 %v315
    %365 = vmatpush.msra.mxu0 %v314
    %366 = vmatpush.msra.mxu0 %v313
    %367 = vmatpush.msra.mxu0 %v312
    %368 = vmatpush.msra.mxu0 %v311
    %369 = vmatpush.msra.mxu0 %v310
    %370 = vmatpush.msra.mxu0 %v309
    %371 = vmatmul.f32.gmra.mxu0 %v350
    %v372 = vpop.f32.mrf.mxu0
    %v373 = vadd.f32 0.0, %v372
    %374 = vmatmul.f32.gmra.mxu0 %v353
    %v375 = vpop.f32.mrf.mxu0
    %v376 = vadd.f32 0.0, %v375
    %377 = vdwg.mxu0
    %v378 = vsub.f32 %v373, %v303
    %v379 = vsub.f32 %v376, %v304
    %v380 = vand.u32 2147483647, %v378
    %v381 = vand.u32 2147483647, %v379
    %v382 = vadd.f32 %v380, %v381
    %383 = vadd.xlane.f32.xlu0 %v382
    %v384 = vpop.xlane.xlu0 %383
    %v385 = vrot.slane %v384, 4
    %v386 = vadd.f32 %v384, %v385
    %v387 = vrot.slane %v386, 2
    %v388 = vadd.f32 %v386, %v387
    %v389 = vrot.slane %v388, 1
    %v390 = vadd.f32 %v388, %v389
    %s391 = vtos %v390
    %v392 = vstv %s391
    %v393 = vmul.f32 %v392, 0.00048828125
    %394 = vst [vmem:[#allocation26] sm:$0x1] %v393
    %v395 = vld [vmem:[#allocation10] sm:$0xff]
    %v396 = vld [vmem:[#allocation10 + $0x8] sm:$0xff]
    %v397 = vld [vmem:[#allocation8] sm:$0xff]
    %v398 = vld [vmem:[#allocation8 + $0x8] sm:$0xff]
    %v399 = vld [vmem:[#allocation2] sm:$0xff]
    %v400 = vld [vmem:[#allocation2 + $0x8] sm:$0xff]
    %v401 = vld [vmem:[%s5] sm:$0xff]
    %v402 = vld [vmem:[%s5 + $0x8] sm:$0xff]
    %v403 = vld [vmem:[%s5 + $0x10] sm:$0xff]
    %v404 = vld [vmem:[%s5 + $0x18] sm:$0xff]
    %v406 = vsel %vm325, %v399, 0
    %v409 = vsel %vm325, %v400, 0
    %411 = vmatpush.msra.mxu0 0.0
    %412 = vmatpush.msra.mxu0 0.0
    %413 = vmatpush.msra.mxu0 0.0
    %414 = vmatpush.msra.mxu0 0.0
    %415 = vmatpush.msra.mxu0 0.0
    %416 = vmatpush.msra.mxu0 0.0
    %417 = vmatpush.msra.mxu0 0.0
    %418 = vmatpush.msra.mxu0 0.0
    %419 = vmatpush.msra.mxu0 0.0
    %420 = vmatpush.msra.mxu0 0.0
    %421 = vmatpush.msra.mxu0 0.0
    %422 = vmatpush.msra.mxu0 0.0
    %423 = vmatpush.msra.mxu0 0.0
    %424 = vmatpush.msra.mxu0 0.0
    %425 = vmatpush.msra.mxu0 %v398
    %426 = vmatpush.msra.mxu0 %v397
    %427 = vmatmul.f32.gmra.mxu0 %v406
    %v428 = vpop.f32.mrf.mxu0
    %v429 = vadd.f32 0.0, %v428
    %430 = vmatmul.f32.gmra.mxu0 %v409
    %v431 = vpop.f32.mrf.mxu0
    %v432 = vadd.f32 0.0, %v431
    %433 = vdwg.mxu0
    %vm434 = vcmask 261120
    %v436 = vsel %vm434, %v429, 0
    %v439 = vsel %vm434, %v432, 0
    %441 = vmatpush.msra.mxu0 0.0
    %442 = vmatpush.msra.mxu0 0.0
    %443 = vmatpush.msra.mxu0 0.0
    %444 = vmatpush.msra.mxu0 0.0
    %445 = vmatpush.msra.mxu0 0.0
    %446 = vmatpush.msra.mxu0 0.0
    %447 = vmatpush.msra.mxu0 0.0
    %448 = vmatpush.msra.mxu0 0.0
    %449 = vmatpush.msra.mxu0 0.0
    %450 = vmatpush.msra.mxu0 0.0
    %451 = vmatpush.msra.mxu0 0.0
    %452 = vmatpush.msra.mxu0 0.0
    %453 = vmatpush.msra.mxu0 %v404
    %454 = vmatpush.msra.mxu0 %v403
    %455 = vmatpush.msra.mxu0 %v402
    %456 = vmatpush.msra.mxu0 %v401
    %457 = vmatmul.f32.gmra.mxu0 %v436
    %v458 = vpop.f32.mrf.mxu0
    %v459 = vadd.f32 0.0, %v458
    %460 = vmatmul.f32.gmra.mxu0 %v439
    %v461 = vpop.f32.mrf.mxu0
    %v462 = vadd.f32 0.0, %v461
    %463 = vdwg.mxu0
    %v464 = vsub.f32 %v459, %v395
    %v465 = vsub.f32 %v462, %v396
    %v466 = vand.u32 2147483647, %v464
    %v467 = vand.u32 2147483647, %v465
    %v468 = vsel %vm434, %v466, 0.0
    %v469 = vsel %vm434, %v467, 0.0
    %v470 = vadd.f32 %v468, %v469
    %471 = vadd.xlane.f32.xlu0 %v470
    %v472 = vpop.xlane.xlu0 %471
    %v473 = vrot.slane %v472, 4
    %v474 = vadd.f32 %v472, %v473
    %v475 = vrot.slane %v474, 2
    %v476 = vadd.f32 %v474, %v475
    %v477 = vrot.slane %v476, 1
    %v478 = vadd.f32 %v476, %v477
    %s479 = vtos %v478
    %v480 = vstv %s479
    %v481 = vmul.f32 %v480, 0.001953125
    %482 = vst [vmem:[#allocation26 + $0x1] sm:$0x1] %v481
    %v483 = vld [vmem:[#allocation7] sm:$0xff]
    %v484 = vld [vmem:[#allocation7 + $0x8] sm:$0xff]
    %v485 = vld [vmem:[#allocation11] sm:$0xff]
    %v486 = vld [vmem:[%s8] sm:$0xff]
    %v487 = vld [vmem:[%s8 + $0x8] sm:$0xff]
    %v488 = vld [vmem:[#allocation13] sm:$0xff]
    %v489 = vld [vmem:[#allocation13 + $0x8] sm:$0xff]
    %v490 = vld [vmem:[#allocation13 + $0x10] sm:$0xff]
    %v491 = vld [vmem:[#allocation13 + $0x18] sm:$0xff]
    %v492 = vld [vmem:[#allocation13 + $0x20] sm:$0xff]
    %v493 = vld [vmem:[#allocation13 + $0x28] sm:$0xff]
    %v494 = vld [vmem:[#allocation13 + $0x30] sm:$0xff]
    %v495 = vld [vmem:[#allocation13 + $0x38] sm:$0xff]
    %vm496 = vcmask 64512
    %v498 = vsel %vm496, %v486, 0
    %v501 = vsel %vm496, %v487, 0
    %503 = vmatpush.msra.mxu0 0.0
    %504 = vmatpush.msra.mxu0 0.0
    %505 = vmatpush.msra.mxu0 0.0
    %506 = vmatpush.msra.mxu0 0.0
    %507 = vmatpush.msra.mxu0 0.0
    %508 = vmatpush.msra.mxu0 0.0
    %509 = vmatpush.msra.mxu0 0.0
    %510 = vmatpush.msra.mxu0 0.0
    %511 = vmatpush.msra.mxu0 0.0
    %512 = vmatpush.msra.mxu0 0.0
    %513 = vmatpush.msra.mxu0 0.0
    %514 = vmatpush.msra.mxu0 0.0
    %515 = vmatpush.msra.mxu0 0.0
    %516 = vmatpush.msra.mxu0 0.0
    %517 = vmatpush.msra.mxu0 0.0
    %518 = vmatpush.msra.mxu0 %v485
    %519 = vmatmul.f32.gmra.mxu0 %v498
    %v520 = vpop.f32.mrf.mxu0
    %v521 = vadd.f32 0.0, %v520
    %522 = vmatmul.f32.gmra.mxu0 %v501
    %v523 = vpop.f32.mrf.mxu0
    %v524 = vadd.f32 0.0, %v523
    %525 = vdwg.mxu0
    %vm526 = vcmask 523264
    %v528 = vsel %vm526, %v521, 0
    %v531 = vsel %vm526, %v524, 0
    %533 = vmatpush.msra.mxu0 0.0
    %534 = vmatpush.msra.mxu0 0.0
    %535 = vmatpush.msra.mxu0 0.0
    %536 = vmatpush.msra.mxu0 0.0
    %537 = vmatpush.msra.mxu0 0.0
    %538 = vmatpush.msra.mxu0 0.0
    %539 = vmatpush.msra.mxu0 0.0
    %540 = vmatpush.msra.mxu0 0.0
    %541 = vmatpush.msra.mxu0 %v495
    %542 = vmatpush.msra.mxu0 %v494
    %543 = vmatpush.msra.mxu0 %v493
    %544 = vmatpush.msra.mxu0 %v492
    %545 = vmatpush.msra.mxu0 %v491
    %546 = vmatpush.msra.mxu0 %v490
    %547 = vmatpush.msra.mxu0 %v489
    %548 = vmatpush.msra.mxu0 %v488
    %549 = vmatmul.f32.gmra.mxu0 %v528
    %v550 = vpop.f32.mrf.mxu0
    %v551 = vadd.f32 0.0, %v550
    %552 = vmatmul.f32.gmra.mxu0 %v531
    %v553 = vpop.f32.mrf.mxu0
    %v554 = vadd.f32 0.0, %v553
    %555 = vdwg.mxu0
    %v556 = vsub.f32 %v551, %v483
    %v557 = vsub.f32 %v554, %v484
    %v558 = vand.u32 2147483647, %v556
    %v559 = vand.u32 2147483647, %v557
    %v560 = vadd.f32 %v558, %v559
    %561 = vadd.xlane.f32.xlu0 %v560
    %v562 = vpop.xlane.xlu0 %561
    %v563 = vrot.slane %v562, 4
    %v564 = vadd.f32 %v562, %v563
    %v565 = vrot.slane %v564, 2
    %v566 = vadd.f32 %v564, %v565
    %v567 = vrot.slane %v566, 1
    %v568 = vadd.f32 %v566, %v567
    %s569 = vtos %v568
    %v570 = vstv %s569
    %v571 = vmul.f32 %v570, 0.00048828125
    %572 = vst [vmem:[#allocation26 + $0x2] sm:$0x1] %v571
    %v573 = vld [vmem:[#allocation10] sm:$0xff]
    %v574 = vld [vmem:[#allocation10 + $0x8] sm:$0xff]
    %v575 = vld [vmem:[#allocation14] sm:$0xff]
    %v576 = vld [vmem:[%s8] sm:$0xff]
    %v577 = vld [vmem:[%s8 + $0x8] sm:$0xff]
    %v578 = vld [vmem:[%s11] sm:$0xff]
    %v579 = vld [vmem:[%s11 + $0x8] sm:$0xff]
    %v581 = vsel %vm496, %v576, 0
    %v584 = vsel %vm496, %v577, 0
    %586 = vmatpush.msra.mxu0 0.0
    %587 = vmatpush.msra.mxu0 0.0
    %588 = vmatpush.msra.mxu0 0.0
    %589 = vmatpush.msra.mxu0 0.0
    %590 = vmatpush.msra.mxu0 0.0
    %591 = vmatpush.msra.mxu0 0.0
    %592 = vmatpush.msra.mxu0 0.0
    %593 = vmatpush.msra.mxu0 0.0
    %594 = vmatpush.msra.mxu0 0.0
    %595 = vmatpush.msra.mxu0 0.0
    %596 = vmatpush.msra.mxu0 0.0
    %597 = vmatpush.msra.mxu0 0.0
    %598 = vmatpush.msra.mxu0 0.0
    %599 = vmatpush.msra.mxu0 0.0
    %600 = vmatpush.msra.mxu0 0.0
    %601 = vmatpush.msra.mxu0 %v575
    %602 = vmatmul.f32.gmra.mxu0 %v581
    %v603 = vpop.f32.mrf.mxu0
    %v604 = vadd.f32 0.0, %v603
    %605 = vmatmul.f32.gmra.mxu0 %v584
    %v606 = vpop.f32.mrf.mxu0
    %v607 = vadd.f32 0.0, %v606
    %608 = vdwg.mxu0
    %v610 = vsel %vm325, %v604, 0
    %v613 = vsel %vm325, %v607, 0
    %615 = vmatpush.msra.mxu0 0.0
    %616 = vmatpush.msra.mxu0 0.0
    %617 = vmatpush.msra.mxu0 0.0
    %618 = vmatpush.msra.mxu0 0.0
    %619 = vmatpush.msra.mxu0 0.0
    %620 = vmatpush.msra.mxu0 0.0
    %621 = vmatpush.msra.mxu0 0.0
    %622 = vmatpush.msra.mxu0 0.0
    %623 = vmatpush.msra.mxu0 0.0
    %624 = vmatpush.msra.mxu0 0.0
    %625 = vmatpush.msra.mxu0 0.0
    %626 = vmatpush.msra.mxu0 0.0
    %627 = vmatpush.msra.mxu0 0.0
    %628 = vmatpush.msra.mxu0 0.0
    %629 = vmatpush.msra.mxu0 %v579
    %630 = vmatpush.msra.mxu0 %v578
    %631 = vmatmul.f32.gmra.mxu0 %v610
    %v632 = vpop.f32.mrf.mxu0
    %v633 = vadd.f32 0.0, %v632
    %634 = vmatmul.f32.gmra.mxu0 %v613
    %v635 = vpop.f32.mrf.mxu0
    %v636 = vadd.f32 0.0, %v635
    %637 = vdwg.mxu0
    %v638 = vsub.f32 %v633, %v573
    %v639 = vsub.f32 %v636, %v574
    %v640 = vand.u32 2147483647, %v638
    %v641 = vand.u32 2147483647, %v639
    %v642 = vsel %vm434, %v640, 0.0
    %v643 = vsel %vm434, %v641, 0.0
    %v644 = vadd.f32 %v642, %v643
    %645 = vadd.xlane.f32.xlu0 %v644
    %v646 = vpop.xlane.xlu0 %645
    %v647 = vrot.slane %v646, 4
    %v648 = vadd.f32 %v646, %v647
    %v649 = vrot.slane %v648, 2
    %v650 = vadd.f32 %v648, %v649
    %v651 = vrot.slane %v650, 1
    %v652 = vadd.f32 %v650, %v651
    %s653 = vtos %v652
    %v654 = vstv %s653
    %v655 = vmul.f32 %v654, 0.001953125
    %656 = vst [vmem:[#allocation26 + $0x3] sm:$0x1] %v655
    %v657 = vld [vmem:[#allocation7] sm:$0xff]
    %v658 = vld [vmem:[#allocation7 + $0x8] sm:$0xff]
    %v659 = vld [vmem:[#allocation16] sm:$0xf]
    %v660 = vld [vmem:[%s13] sm:$0xff]
    %v661 = vld [vmem:[%s13 + $0x8] sm:$0xff]
    %v662 = vld [vmem:[#allocation17] sm:$0xff]
    %v663 = vld [vmem:[#allocation17 + $0x8] sm:$0xff]
    %v664 = vld [vmem:[#allocation17 + $0x10] sm:$0xff]
    %v665 = vld [vmem:[#allocation17 + $0x18] sm:$0xff]
    %vm666 = vcmask 31744
    %v668 = vsel %vm666, %v660, 0
    %v671 = vsel %vm666, %v661, 0
    %vm673 = vcmask 1043456
    %v675 = vsel %vm673, %v659, 0
    %677 = vmatpush.msra.mxu0 0.0
    %678 = vmatpush.msra.mxu0 0.0
    %679 = vmatpush.msra.mxu0 0.0
    %680 = vmatpush.msra.mxu0 0.0
    %681 = vmatpush.msra.mxu0 0.0
    %682 = vmatpush.msra.mxu0 0.0
    %683 = vmatpush.msra.mxu0 0.0
    %684 = vmatpush.msra.mxu0 0.0
    %685 = vmatpush.msra.mxu0 0.0
    %686 = vmatpush.msra.mxu0 0.0
    %687 = vmatpush.msra.mxu0 0.0
    %688 = vmatpush.msra.mxu0 0.0
    %689 = vmatpush.msra.mxu0 0.0
    %690 = vmatpush.msra.mxu0 0.0
    %691 = vmatpush.msra.mxu0 0.0
    %692 = vmatpush.msra.mxu0 %v675
    %693 = vmatmul.f32.gmra.mxu0 %v668
    %v694 = vpop.f32.mrf.mxu0
    %v695 = vadd.f32 0.0, %v694
    %696 = vmatmul.f32.gmra.mxu0 %v671
    %v697 = vpop.f32.mrf.mxu0
    %v698 = vadd.f32 0.0, %v697
    %699 = vdwg.mxu0
    %v701 = vsel %vm434, %v695, 0
    %v704 = vsel %vm434, %v698, 0
    %706 = vmatpush.msra.mxu0 0.0
    %707 = vmatpush.msra.mxu0 0.0
    %708 = vmatpush.msra.mxu0 0.0
    %709 = vmatpush.msra.mxu0 0.0
    %710 = vmatpush.msra.mxu0 0.0
    %711 = vmatpush.msra.mxu0 0.0
    %712 = vmatpush.msra.mxu0 0.0
    %713 = vmatpush.msra.mxu0 0.0
    %714 = vmatpush.msra.mxu0 0.0
    %715 = vmatpush.msra.mxu0 0.0
    %716 = vmatpush.msra.mxu0 0.0
    %717 = vmatpush.msra.mxu0 0.0
    %718 = vmatpush.msra.mxu0 %v665
    %719 = vmatpush.msra.mxu0 %v664
    %720 = vmatpush.msra.mxu0 %v663
    %721 = vmatpush.msra.mxu0 %v662
    %722 = vmatmul.f32.gmra.mxu0 %v701
    %v723 = vpop.f32.mrf.mxu0
    %v724 = vadd.f32 0.0, %v723
    %725 = vmatmul.f32.gmra.mxu0 %v704
    %v726 = vpop.f32.mrf.mxu0
    %v727 = vadd.f32 0.0, %v726
    %728 = vdwg.mxu0
    %v729 = vsub.f32 %v724, %v657
    %v730 = vsub.f32 %v727, %v658
    %v731 = vand.u32 2147483647, %v729
    %v732 = vand.u32 2147483647, %v730
    %v733 = vadd.f32 %v731, %v732
    %734 = vadd.xlane.f32.xlu0 %v733
    %v735 = vpop.xlane.xlu0 %734
    %v736 = vrot.slane %v735, 4
    %v737 = vadd.f32 %v735, %v736
    %v738 = vrot.slane %v737, 2
    %v739 = vadd.f32 %v737, %v738
    %v740 = vrot.slane %v739, 1
    %v741 = vadd.f32 %v739, %v740
    %s742 = vtos %v741
    %v743 = vstv %s742
    %v744 = vmul.f32 %v743, 0.00048828125
    %745 = vst [vmem:[#allocation26 + $0x4] sm:$0x1] %v744
    %v746 = vld [vmem:[#allocation10] sm:$0xff]
    %v747 = vld [vmem:[#allocation10 + $0x8] sm:$0xff]
    %v748 = vld [vmem:[%s15] sm:$0xf]
    %v749 = vld [vmem:[%s13] sm:$0xff]
    %v750 = vld [vmem:[%s13 + $0x8] sm:$0xff]
    %v751 = vld [vmem:[#allocation19] sm:$0xff]
    %v753 = vsel %vm666, %v749, 0
    %v756 = vsel %vm666, %v750, 0
    %v759 = vsel %vm673, %v748, 0
    %761 = vmatpush.msra.mxu0 0.0
    %762 = vmatpush.msra.mxu0 0.0
    %763 = vmatpush.msra.mxu0 0.0
    %764 = vmatpush.msra.mxu0 0.0
    %765 = vmatpush.msra.mxu0 0.0
    %766 = vmatpush.msra.mxu0 0.0
    %767 = vmatpush.msra.mxu0 0.0
    %768 = vmatpush.msra.mxu0 0.0
    %769 = vmatpush.msra.mxu0 0.0
    %770 = vmatpush.msra.mxu0 0.0
    %771 = vmatpush.msra.mxu0 0.0
    %772 = vmatpush.msra.mxu0 0.0
    %773 = vmatpush.msra.mxu0 0.0
    %774 = vmatpush.msra.mxu0 0.0
    %775 = vmatpush.msra.mxu0 0.0
    %776 = vmatpush.msra.mxu0 %v759
    %777 = vmatmul.f32.gmra.mxu0 %v753
    %v778 = vpop.f32.mrf.mxu0
    %v779 = vadd.f32 0.0, %v778
    %780 = vmatmul.f32.gmra.mxu0 %v756
    %v781 = vpop.f32.mrf.mxu0
    %v782 = vadd.f32 0.0, %v781
    %783 = vdwg.mxu0
    %v785 = vsel %vm496, %v779, 0
    %v788 = vsel %vm496, %v782, 0
    %790 = vmatpush.msra.mxu0 0.0
    %791 = vmatpush.msra.mxu0 0.0
    %792 = vmatpush.msra.mxu0 0.0
    %793 = vmatpush.msra.mxu0 0.0
    %794 = vmatpush.msra.mxu0 0.0
    %795 = vmatpush.msra.mxu0 0.0
    %796 = vmatpush.msra.mxu0 0.0
    %797 = vmatpush.msra.mxu0 0.0
    %798 = vmatpush.msra.mxu0 0.0
    %799 = vmatpush.msra.mxu0 0.0
    %800 = vmatpush.msra.mxu0 0.0
    %801 = vmatpush.msra.mxu0 0.0
    %802 = vmatpush.msra.mxu0 0.0
    %803 = vmatpush.msra.mxu0 0.0
    %804 = vmatpush.msra.mxu0 0.0
    %805 = vmatpush.msra.mxu0 %v751
    %806 = vmatmul.f32.gmra.mxu0 %v785
    %v807 = vpop.f32.mrf.mxu0
    %v808 = vadd.f32 0.0, %v807
    %809 = vmatmul.f32.gmra.mxu0 %v788
    %v810 = vpop.f32.mrf.mxu0
    %v811 = vadd.f32 0.0, %v810
    %812 = vdwg.mxu0
    %v813 = vsub.f32 %v808, %v746
    %v814 = vsub.f32 %v811, %v747
    %v815 = vand.u32 2147483647, %v813
    %v816 = vand.u32 2147483647, %v814
    %v817 = vsel %vm434, %v815, 0.0
    %v818 = vsel %vm434, %v816, 0.0
    %v819 = vadd.f32 %v817, %v818
    %820 = vadd.xlane.f32.xlu0 %v819
    %v821 = vpop.xlane.xlu0 %820
    %v822 = vrot.slane %v821, 4
    %v823 = vadd.f32 %v821, %v822
    %v824 = vrot.slane %v823, 2
    %v825 = vadd.f32 %v823, %v824
    %v826 = vrot.slane %v825, 1
    %v827 = vadd.f32 %v825, %v826
    %s828 = vtos %v827
    %v829 = vstv %s828
    %v830 = vmul.f32 %v829, 0.001953125
    %831 = vst [vmem:[#allocation26 + $0x5] sm:$0x1] %v830
    %v832 = vld [vmem:[#allocation7] sm:$0xff]
    %v833 = vld [vmem:[#allocation7 + $0x8] sm:$0xff]
    %v834 = vld [vmem:[%s17] sm:$0x3]
    %v835 = vld [vmem:[%s18] sm:$0xff]
    %v836 = vld [vmem:[%s18 + $0x8] sm:$0xff]
    %v837 = vld [vmem:[#allocation20] sm:$0xff]
    %v838 = vld [vmem:[#allocation20 + $0x8] sm:$0xff]
    %vm839 = vcmask 15360
    %v841 = vsel %vm839, %v835, 0
    %v844 = vsel %vm839, %v836, 0
    %vm846 = vcmask 1041408
    %v848 = vsel %vm846, %v834, 0
    %850 = vmatpush.msra.mxu0 0.0
    %851 = vmatpush.msra.mxu0 0.0
    %852 = vmatpush.msra.mxu0 0.0
    %853 = vmatpush.msra.mxu0 0.0
    %854 = vmatpush.msra.mxu0 0.0
    %855 = vmatpush.msra.mxu0 0.0
    %856 = vmatpush.msra.mxu0 0.0
    %857 = vmatpush.msra.mxu0 0.0
    %858 = vmatpush.msra.mxu0 0.0
    %859 = vmatpush.msra.mxu0 0.0
    %860 = vmatpush.msra.mxu0 0.0
    %861 = vmatpush.msra.mxu0 0.0
    %862 = vmatpush.msra.mxu0 0.0
    %863 = vmatpush.msra.mxu0 0.0
    %864 = vmatpush.msra.mxu0 0.0
    %865 = vmatpush.msra.mxu0 %v848
    %866 = vmatmul.f32.gmra.mxu0 %v841
    %v867 = vpop.f32.mrf.mxu0
    %v868 = vadd.f32 0.0, %v867
    %869 = vmatmul.f32.gmra.mxu0 %v844
    %v870 = vpop.f32.mrf.mxu0
    %v871 = vadd.f32 0.0, %v870
    %872 = vdwg.mxu0
    %v874 = vsel %vm325, %v868, 0
    %v877 = vsel %vm325, %v871, 0
    %879 = vmatpush.msra.mxu0 0.0
    %880 = vmatpush.msra.mxu0 0.0
    %881 = vmatpush.msra.mxu0 0.0
    %882 = vmatpush.msra.mxu0 0.0
    %883 = vmatpush.msra.mxu0 0.0
    %884 = vmatpush.msra.mxu0 0.0
    %885 = vmatpush.msra.mxu0 0.0
    %886 = vmatpush.msra.mxu0 0.0
    %887 = vmatpush.msra.mxu0 0.0
    %888 = vmatpush.msra.mxu0 0.0
    %889 = vmatpush.msra.mxu0 0.0
    %890 = vmatpush.msra.mxu0 0.0
    %891 = vmatpush.msra.mxu0 0.0
    %892 = vmatpush.msra.mxu0 0.0
    %893 = vmatpush.msra.mxu0 %v838
    %894 = vmatpush.msra.mxu0 %v837
    %895 = vmatmul.f32.gmra.mxu0 %v874
    %v896 = vpop.f32.mrf.mxu0
    %v897 = vadd.f32 0.0, %v896
    %898 = vmatmul.f32.gmra.mxu0 %v877
    %v899 = vpop.f32.mrf.mxu0
    %v900 = vadd.f32 0.0, %v899
    %901 = vdwg.mxu0
    %v902 = vsub.f32 %v897, %v832
    %v903 = vsub.f32 %v900, %v833
    %v904 = vand.u32 2147483647, %v902
    %v905 = vand.u32 2147483647, %v903
    %v906 = vadd.f32 %v904, %v905
    %907 = vadd.xlane.f32.xlu0 %v906
    %v908 = vpop.xlane.xlu0 %907
    %v909 = vrot.slane %v908, 4
    %v910 = vadd.f32 %v908, %v909
    %v911 = vrot.slane %v910, 2
    %v912 = vadd.f32 %v910, %v911
    %v913 = vrot.slane %v912, 1
    %v914 = vadd.f32 %v912, %v913
    %s915 = vtos %v914
    %v916 = vstv %s915
    %v917 = vmul.f32 %v916, 0.00048828125
    %918 = vst [vmem:[#allocation26 + $0x6] sm:$0x1] %v917
    %v919 = vld [vmem:[#allocation10] sm:$0xff]
    %v920 = vld [vmem:[#allocation10 + $0x8] sm:$0xff]
    %v921 = vld [vmem:[#allocation22] sm:$0x3]
    %v922 = vld [vmem:[%s18] sm:$0xff]
    %v923 = vld [vmem:[%s18 + $0x8] sm:$0xff]
    %v924 = vld [vmem:[%s21] sm:$0xf]
    %v926 = vsel %vm839, %v922, 0
    %v929 = vsel %vm839, %v923, 0
    %v932 = vsel %vm846, %v921, 0
    %934 = vmatpush.msra.mxu0 0.0
    %935 = vmatpush.msra.mxu0 0.0
    %936 = vmatpush.msra.mxu0 0.0
    %937 = vmatpush.msra.mxu0 0.0
    %938 = vmatpush.msra.mxu0 0.0
    %939 = vmatpush.msra.mxu0 0.0
    %940 = vmatpush.msra.mxu0 0.0
    %941 = vmatpush.msra.mxu0 0.0
    %942 = vmatpush.msra.mxu0 0.0
    %943 = vmatpush.msra.mxu0 0.0
    %944 = vmatpush.msra.mxu0 0.0
    %945 = vmatpush.msra.mxu0 0.0
    %946 = vmatpush.msra.mxu0 0.0
    %947 = vmatpush.msra.mxu0 0.0
    %948 = vmatpush.msra.mxu0 0.0
    %949 = vmatpush.msra.mxu0 %v932
    %950 = vmatmul.f32.gmra.mxu0 %v926
    %v951 = vpop.f32.mrf.mxu0
    %v952 = vadd.f32 0.0, %v951
    %953 = vmatmul.f32.gmra.mxu0 %v929
    %v954 = vpop.f32.mrf.mxu0
    %v955 = vadd.f32 0.0, %v954
    %956 = vdwg.mxu0
    %v958 = vsel %vm666, %v952, 0
    %v961 = vsel %vm666, %v955, 0
    %v964 = vsel %vm673, %v924, 0
    %966 = vmatpush.msra.mxu0 0.0
    %967 = vmatpush.msra.mxu0 0.0
    %968 = vmatpush.msra.mxu0 0.0
    %969 = vmatpush.msra.mxu0 0.0
    %970 = vmatpush.msra.mxu0 0.0
    %971 = vmatpush.msra.mxu0 0.0
    %972 = vmatpush.msra.mxu0 0.0
    %973 = vmatpush.msra.mxu0 0.0
    %974 = vmatpush.msra.mxu0 0.0
    %975 = vmatpush.msra.mxu0 0.0
    %976 = vmatpush.msra.mxu0 0.0
    %977 = vmatpush.msra.mxu0 0.0
    %978 = vmatpush.msra.mxu0 0.0
    %979 = vmatpush.msra.mxu0 0.0
    %980 = vmatpush.msra.mxu0 0.0
    %981 = vmatpush.msra.mxu0 %v964
    %982 = vmatmul.f32.gmra.mxu0 %v958
    %v983 = vpop.f32.mrf.mxu0
    %v984 = vadd.f32 0.0, %v983
    %985 = vmatmul.f32.gmra.mxu0 %v961
    %v986 = vpop.f32.mrf.mxu0
    %v987 = vadd.f32 0.0, %v986
    %988 = vdwg.mxu0
    %v989 = vsub.f32 %v984, %v919
    %v990 = vsub.f32 %v987, %v920
    %v991 = vand.u32 2147483647, %v989
    %v992 = vand.u32 2147483647, %v990
    %v993 = vsel %vm434, %v991, 0.0
    %v994 = vsel %vm434, %v992, 0.0
    %v995 = vadd.f32 %v993, %v994
    %996 = vadd.xlane.f32.xlu0 %v995
    %v997 = vpop.xlane.xlu0 %996
    %v998 = vrot.slane %v997, 4
    %v999 = vadd.f32 %v997, %v998
    %v1000 = vrot.slane %v999, 2
    %v1001 = vadd.f32 %v999, %v1000
    %v1002 = vrot.slane %v1001, 1
    %v1003 = vadd.f32 %v1001, %v1002
    %s1004 = vtos %v1003
    %v1005 = vstv %s1004
    %v1006 = vmul.f32 %v1005, 0.001953125
    %1007 = vst [vmem:[#allocation26 + $0x7] sm:$0x1] %v1006
    %v1008 = vld [vmem:[#allocation7] sm:$0xff]
    %v1009 = vld [vmem:[#allocation7 + $0x8] sm:$0xff]
    %v1010 = vld [vmem:[#allocation23] sm:$0xff]
    %v1011 = vld [vmem:[#allocation23 + $0x8] sm:$0xff]
    %v1012 = vsub.f32 %v1010, %v1008
    %v1013 = vsub.f32 %v1011, %v1009
    %v1014 = vand.u32 2147483647, %v1012
    %v1015 = vand.u32 2147483647, %v1013
    %v1016 = vadd.f32 %v1014, %v1015
    %1017 = vadd.xlane.f32.xlu0 %v1016
    %v1018 = vpop.xlane.xlu0 %1017
    %v1019 = vrot.slane %v1018, 4
    %v1020 = vadd.f32 %v1018, %v1019
    %v1021 = vrot.slane %v1020, 2
    %v1022 = vadd.f32 %v1020, %v1021
    %v1023 = vrot.slane %v1022, 1
    %v1024 = vadd.f32 %v1022, %v1023
    %s1025 = vtos %v1024
    %v1026 = vstv %s1025
    %v1027 = vmul.f32 %v1026, 0.00048828125
    %1028 = vst [vmem:[#allocation26 + $0x8] sm:$0x1] %v1027
    %v1029 = vld [vmem:[#allocation10] sm:$0xff]
    %v1030 = vld [vmem:[#allocation10 + $0x8] sm:$0xff]
    %v1031 = vld [vmem:[#allocation25] sm:$0xff]
    %v1032 = vld [vmem:[#allocation25 + $0x8] sm:$0xff]
    %v1033 = vsub.f32 %v1031, %v1029
    %v1034 = vsub.f32 %v1032, %v1030
    %v1035 = vand.u32 2147483647, %v1033
    %v1036 = vand.u32 2147483647, %v1034
    %v1037 = vsel %vm434, %v1035, 0.0
    %v1038 = vsel %vm434, %v1036, 0.0
    %v1039 = vadd.f32 %v1037, %v1038
    %1040 = vadd.xlane.f32.xlu0 %v1039
    %v1041 = vpop.xlane.xlu0 %1040
    %v1042 = vrot.slane %v1041, 4
    %v1043 = vadd.f32 %v1041, %v1042
    %v1044 = vrot.slane %v1043, 2
    %v1045 = vadd.f32 %v1043, %v1044
    %v1046 = vrot.slane %v1045, 1
    %v1047 = vadd.f32 %v1045, %v1046
    %s1048 = vtos %v1047
    %v1049 = vstv %s1048
    %v1050 = vmul.f32 %v1049, 0.001953125
    %1051 = vst [vmem:[#allocation26 + $0x9] sm:$0x1] %v1050
    // Predicated region
    $region158: #{tpu_custom_call.1} parent=1 // pred_check
      _
    $region159: #{tpu_custom_call.1} parent=1 // pred_check_branch
      %1053 = sbr.rel (0) target = $region161
    $region160: #{tpu_custom_call.1} parent=1 // pred_region
      %1055 = vsyncadd [#allocation4], 0
      %s1056 = sshll.u32 [#allocation26], 4
      %s1057 = int_to_ptr.vmem [resolvable:$true] %s1056
      %s1058 = sshll.u32 %s24, 4
      %s1059 = int_to_ptr.hbm [resolvable:$true] %s1058
      %1064 = dma.vmem_to_hbm [thread:$0]  %s1057, 256, %s1059, [#allocation4], 128, 128, 8
    $region161: #{tpu_custom_call.1} parent=1 // pred_fallthru
      _
    // Predicated region
    $region162: #{tpu_custom_call.1} parent=1 // pred_check
      _
    $region163: #{tpu_custom_call.1} parent=1 // pred_check_branch
      %1066 = sbr.rel (0) target = $region165
    $region164: #{tpu_custom_call.1} parent=1 // pred_region
      %1068 = dma.done [#allocation4], 256
    $region165: #{tpu_custom_call.1} parent=1 // pred_fallthru
      _
    %1069 = vsyncpa [#allocation3], 1
    %1070 = vsyncpa [#allocation6], 1
    %1071 = vsyncpa [#allocation9], 1
    %1072 = vsyncpa [#allocation12], 1
    %1073 = vsyncpa [#allocation15], 1
    %1074 = vsyncpa [#allocation18], 1
    %1075 = vsyncpa [#allocation21], 1
    %1076 = vsyncpa [#allocation24], 1
    %1077 = vsyncpa [#allocation4], 1

</llo_original>
